<compile_context>
chip_gen: v6e
topology: v6e:2x2x1
jax: 0.10.0
libtpu: 0.0.40
codegen_flags: <defaults>
</compile_context>

<pallas_src>
import functools

import jax
import jax.numpy as jnp
from jax import lax
from jax.experimental import pallas as pl
from jax.experimental.pallas import tpu as pltpu


# ----------------------------------------------------------------------------
# Pallas kernel
# ----------------------------------------------------------------------------
def _vq_kernel(x_ref, e_ref, esqh_ref, q_ref, idx_ref, sse_ref, *,
               distance_bf16, gather_bf16):
    """One grid step = one tile of TN tokens.

    x_ref    : (D, TN)  input tile, PyTorch (embedding_dim, tokens) layout
    e_ref    : (D, K)   codebook e_i_ts (constant across the grid)
    esqh_ref : (K, 1)   0.5 * sum(e_i_ts**2, axis=0)
    q_ref    : (D, TN)  quantized output tile
    idx_ref  : (1, TN)  int32 encoding indices (lane-dense)
    sse_ref  : (1, TN)  per-token sum((x - q)**2), reduced over D
    """
    x = x_ref[...]                                        # (D, TN)
    e = e_ref[...]                                        # (D, K)
    k_codes = e.shape[1]

    # --- distances in an argmin-invariant form: d = 0.5*||e_k||^2 - e_k.x_n ---
    md = jnp.bfloat16 if distance_bf16 else jnp.float32
    score = lax.dot_general(                               # (K, TN) = E^T x
        e.astype(md), x.astype(md),
        dimension_numbers=(((0,), (0,)), ((), ())),        # contract over D
        preferred_element_type=jnp.float32)
    d = esqh_ref[...] - score                              # (K, TN)

    # --- first-occurrence argmin over K (sublane axis), torch tie-breaking ---
    dmin = jnp.min(d, axis=0, keepdims=True)               # (1, TN)
    kio = lax.broadcasted_iota(jnp.int32, d.shape, 0)      # (K, TN)
    idx_row = jnp.min(jnp.where(d == dmin, kio, k_codes),
                      axis=0, keepdims=True)               # (1, TN) int32
    idx_ref[...] = idx_row

    # --- codebook gather as a straight (D,K)@(K,TN) MXU matmul ---------------
    mg = jnp.bfloat16 if gather_bf16 else jnp.float32
    onehot = (kio == idx_row).astype(mg)                   # (K, TN), exact 0/1
    q = jnp.dot(e.astype(mg), onehot,
                preferred_element_type=jnp.float32)        # (D, TN)
    q_ref[...] = q.astype(q_ref.dtype)

    diff = x.astype(jnp.float32) - q
    sse_ref[...] = jnp.sum(diff * diff, axis=0, keepdims=True)   # (1, TN)


# ----------------------------------------------------------------------------
# VMEM-aware tiling
# ----------------------------------------------------------------------------
def _vmem_capacity_bytes():
    try:
        return int(pltpu.get_tpu_info().vmem_capacity_bytes)
    except Exception:
        return 64 << 20          # v7x-conservative fallback


def _footprint_bytes(tn, d, k):
    f32 = 4
    io = 2 * 2 * d * tn * f32                    # x in + q out, double-buffered
    io += 2 * 2 * max(tn, 128) * f32             # idx + sse rows, double-buffered
    consts = 2 * (d * k * f32 + k * 128 * f32)   # codebook + esq (conservative)
    work = 3 * k * tn * f32                      # d, iota/one-hot, argmin temps
    work += 2 * (d * tn + d * k)                 # bf16 operand copies
    return io + consts + work


def _pick_token_tile(n, d, k, vmem_capacity):
    """Largest lane-dense token tile that fits VMEM and keeps >=8 (then 4, 2)
    grid steps so both v7x TensorCores get pipelined work."""
    budget = int(vmem_capacity * 0.7)
    candidates = [t for t in (2048, 1024, 512, 256, 128) if n % t == 0]
    for min_steps in (8, 4, 2, 1):
        for t in candidates:                     # descending: biggest first
            if n // t >= min_steps and _footprint_bytes(t, d, k) <= budget:
                return t
    if candidates:
        # TODO(synk): for very large K an inner fori_loop over token sub-chunks
        # would shrink the (chunk, K) working set without shrinking the DMA tile.
        return candidates[-1]
    return n                                     # small/odd N: one full block


# ----------------------------------------------------------------------------
# pallas_call builder + wrapper (PyTorch (D, N) in / (D, N) out)
# ----------------------------------------------------------------------------
def _build_call(D, N, K, tn, out_dtype, *, distance_bf16, gather_bf16,
                single_buffer_consts, vmem_limit):
    kernel = functools.partial(_vq_kernel, distance_bf16=distance_bf16,
                               gather_bf16=gather_bf16)
    const_kw = dict(pipeline_mode=pl.Buffered(1)) if single_buffer_consts else {}
    return pl.pallas_call(
        kernel,
        out_shape=(
            jax.ShapeDtypeStruct((D, N), out_dtype),       # quantized_x
            jax.ShapeDtypeStruct((1, N), jnp.int32),        # encoding indices
            jax.ShapeDtypeStruct((1, N), jnp.float32),      # per-token SSE
        ),
        grid_spec=pltpu.PrefetchScalarGridSpec(
            num_scalar_prefetch=0,
            grid=(N // tn,),
            in_specs=[
                pl.BlockSpec((D, tn), lambda i: (0, i)),             # x tile
                pl.BlockSpec((D, K), lambda i: (0, 0), **const_kw),  # codebook
                pl.BlockSpec((K, 1), lambda i: (0, 0), **const_kw),  # 0.5*||E||^2
            ],
            out_specs=(
                pl.BlockSpec((D, tn), lambda i: (0, i)),
                pl.BlockSpec((1, tn), lambda i: (0, i)),    # lane-dense idx
                pl.BlockSpec((1, tn), lambda i: (0, i)),
            ),
        ),
        compiler_params=pltpu.CompilerParams(
            dimension_semantics=("parallel",),
            vmem_limit_bytes=int(vmem_limit),
        ),
    )


def vector_quantizer_forward(x, e_i_ts, *, use_ema=True, distance_bf16=True,
                             gather_bf16=False, token_tile=None):
    """x: (D, N), e_i_ts: (D, K). Mirrors VectorQuantizer.forward (inference).

    Returns (quantized_x, dictionary_loss, commitment_loss, encoding_indices).
    """
    x = jnp.asarray(x)
    e_i_ts = jnp.asarray(e_i_ts)
    D, N = x.shape
    D2, K = e_i_ts.shape
    assert D == D2, "embedding_dim mismatch between x and codebook"

    cap = _vmem_capacity_bytes()
    tn = int(token_tile) if token_tile is not None else _pick_token_tile(N, D, K, cap)
    assert N % tn == 0

    esq_half = (0.5 * jnp.sum(e_i_ts.astype(jnp.float32) ** 2, axis=0)
                ).reshape(K, 1)
    vmem_limit = min(cap, max(32 << 20,
                              _footprint_bytes(tn, D, K) * 3 // 2 + (4 << 20)))

    common = dict(distance_bf16=distance_bf16, gather_bf16=gather_bf16,
                  vmem_limit=vmem_limit)
    try:
        call = _build_call(D, N, K, tn, x.dtype, single_buffer_consts=True, **common)
        q, idx, sse = call(x, e_i_ts, esq_half)
    except Exception:
        # Older JAX without BlockSpec pipeline_mode support: plain double-buffer.
        call = _build_call(D, N, K, tn, x.dtype, single_buffer_consts=False, **common)
        q, idx, sse = call(x, e_i_ts, esq_half)

    mse = jnp.sum(sse) / (D * N)
    commitment_loss = mse
    dictionary_loss = None if use_ema else mse
    # Straight-through estimator x + (q - x).detach() has forward value == q.
    return q, dictionary_loss, commitment_loss, idx.reshape(-1)


# ----------------------------------------------------------------------------
# Pure-JAX reference mirroring the PyTorch forward
# ----------------------------------------------------------------------------
def vector_quantizer_ref(x, e_i_ts, *, use_ema=True):
    flat_x = x.T                                              # (N, D)
    distances = (jnp.sum(flat_x ** 2, axis=1, keepdims=True)
                 - 2.0 * jnp.matmul(flat_x, e_i_ts,
                                    precision=lax.Precision.HIGHEST)
                 + jnp.sum(e_i_ts ** 2, axis=0, keepdims=True))
    idx = jnp.argmin(distances, axis=1)
    q = e_i_ts[:, idx]                                        # (D, N)
    mse = jnp.mean((x - q) ** 2)
    dictionary_loss = None if use_ema else mse
    return q, dictionary_loss, mse, idx, distances


# ----------------------------------------------------------------------------
if __name__ == "__main__":
    embedding_dim = 64       # D
    num_embeddings = 128     # K
    num_vectors = 512        # N  (x is (D, N) per VectorQuantizer.forward)

    key = jax.random.PRNGKey(0)
    k_x, k_e = jax.random.split(key)
    limit = 3 ** 0.5
    e_i_ts = jax.random.uniform(k_e, (embedding_dim, num_embeddings),
                                jnp.float32, minval=-limit, maxval=limit)
    x = jax.random.normal(k_x, (embedding_dim, num_vectors), jnp.float32)

    q_ref, dict_ref, commit_ref, idx_ref, d_ref = vector_quantizer_ref(
        x, e_i_ts, use_ema=False)
    d_min_ref = d_ref.min(axis=1)

    # --- exact mode (f32 distance matmul): strict parity with the reference ---
    q32, dl32, cl32, idx32 = vector_quantizer_forward(
        x, e_i_ts, use_ema=False, distance_bf16=False)
    q32 = jax.block_until_ready(q32)
    assert q32.shape == x.shape and idx32.shape == (num_vectors,)
    assert jnp.allclose(q32, e_i_ts[:, idx32], atol=1e-5, rtol=1e-5), "gather mismatch"
    chosen32 = jnp.take_along_axis(d_ref, idx32[:, None], axis=1)[:, 0]
    assert float(jnp.max(chosen32 - d_min_ref)) <= 1e-3, "non-optimal codes (f32)"
    match32 = float(jnp.mean((idx32 == idx_ref).astype(jnp.float32)))
    assert match32 >= 0.99, f"index mismatch (f32 mode): {match32}"
    assert jnp.allclose(cl32, commit_ref, atol=1e-5, rtol=1e-5), "loss mismatch"
    assert dl32 is not None and jnp.allclose(dl32, dict_ref, atol=1e-5, rtol=1e-5)

    # --- default fast path (bf16 distance matmul on the MXU) ------------------
    q, dl, cl, idx = vector_quantizer_forward(x, e_i_ts, use_ema=False)
    q = jax.block_until_ready(q)
    assert q.shape == x.shape and idx.shape == (num_vectors,)
    # Gather stays exact: quantized vectors equal the selected codebook columns.
    assert jnp.allclose(q, e_i_ts[:, idx], atol=1e-5, rtol=1e-5), "gather mismatch"
    # Any index differing from the f32 reference must be a near-tie
    # (typical best/second-best gap here is ~4.5; bf16 error is ~0.1).
    chosen = jnp.take_along_axis(d_ref, idx[:, None], axis=1)[:, 0]
    assert float(jnp.max(chosen - d_min_ref)) <= 1.0, "non-near-optimal codes (bf16)"
    match = float(jnp.mean((idx == idx_ref).astype(jnp.float32)))
    assert match >= 0.95, f"too many index flips (bf16 mode): {match}"
    # Losses are consistent with the kernel's own code choice and near the ref.
    mse_own = jnp.mean((x - e_i_ts[:, idx]) ** 2)
    assert jnp.allclose(cl, mse_own, atol=1e-5, rtol=1e-5), "in-kernel SSE mismatch"
    assert jnp.allclose(cl, commit_ref, atol=5e-3, rtol=5e-3), "loss drift too large"
    assert dl is not None

    print("KERNEL_OK")
</pallas_src>

<mosaic_0001>
module attributes {stable_mosaic.version = 11 : i64} {
  func.func @_vq_kernel(%arg0: i32, %arg1: memref<64x128xf32, #tpu.memory_space<vmem>>, %arg2: memref<64x128xf32, #tpu.memory_space<vmem>>, %arg3: memref<128x1xf32, #tpu.memory_space<vmem>>, %arg4: memref<64x128xf32, #tpu.memory_space<vmem>>, %arg5: memref<1x128xi32, #tpu.memory_space<vmem>>, %arg6: memref<1x128xf32, #tpu.memory_space<vmem>>) attributes {dimension_semantics = [#tpu.dimension_semantics<parallel>], iteration_bounds = array<i64: 4>, scalar_prefetch = 0 : i64, scratch_operands = 0 : i64, tpu.core_type = #tpu.core_type<tc>, window_params = [{transform_indices = @transform_0, window_bounds = array<i64: 64, 128>}, {pipeline_mode = #tpu.pipeline_mode<synchronous>, transform_indices = @transform_1, window_bounds = array<i64: 64, 128>}, {pipeline_mode = #tpu.pipeline_mode<synchronous>, transform_indices = @transform_2, window_bounds = array<i64: 128, 1>}, {transform_indices = @transform_3, window_bounds = array<i64: 64, 128>}, {transform_indices = @transform_4, window_bounds = array<i64: 1, 128>}, {transform_indices = @transform_5, window_bounds = array<i64: 1, 128>}]} {
    %c0 = arith.constant 0 : index
    %c0_0 = arith.constant 0 : index
    %0 = vector.load %arg1[%c0, %c0_0] : memref<64x128xf32, #tpu.memory_space<vmem>>, vector<64x128xf32>
    %c0_1 = arith.constant 0 : index
    %c0_2 = arith.constant 0 : index
    %1 = vector.load %arg2[%c0_1, %c0_2] : memref<64x128xf32, #tpu.memory_space<vmem>>, vector<64x128xf32>
    %cst = arith.constant dense<0.000000e+00> : vector<128x128xf32>
    %2 = tpu.matmul %1, %0, %cst {dimension_numbers = #tpu.dot_dimension_numbers<[0], [0], [1], [1], [0, 1, 1, 1], [], []>} : vector<64x128xf32>, vector<64x128xf32>, vector<128x128xf32> -> vector<128x128xf32>
    %c0_3 = arith.constant 0 : index
    %c0_4 = arith.constant 0 : index
    %3 = vector.load %arg3[%c0_3, %c0_4] : memref<128x1xf32, #tpu.memory_space<vmem>>, vector<128x1xf32>
    %4 = vector.broadcast %3 : vector<128x1xf32> to vector<128x128xf32>
    %5 = arith.subf %4, %2 : vector<128x128xf32>
    %cst_5 = arith.constant dense<0x7F800000> : vector<128xf32>
    %6 = vector.multi_reduction <minimumf>, %5, %cst_5 [0] : vector<128x128xf32> to vector<128xf32>
    %7 = vector.shape_cast %6 : vector<128xf32> to vector<1x128xf32>
    %8 = tpu.iota {dimensions = array<i32: 0>} : vector<128x128xi32>
    %9 = vector.broadcast %7 : vector<1x128xf32> to vector<128x128xf32>
    %10 = arith.cmpf oeq, %5, %9 : vector<128x128xf32>
    %c128_i32 = arith.constant 128 : i32
    %11 = vector.broadcast %c128_i32 : i32 to vector<128x128xi32>
    %12 = arith.select %10, %8, %11 : vector<128x128xi1>, vector<128x128xi32>
    %cst_6 = arith.constant dense<2147483647> : vector<128xi32>
    %13 = vector.multi_reduction <minsi>, %12, %cst_6 [0] : vector<128x128xi32> to vector<128xi32>
    %14 = vector.shape_cast %13 : vector<128xi32> to vector<1x128xi32>
    %c0_7 = arith.constant 0 : index
    %c0_8 = arith.constant 0 : index
    %15 = vector.load %arg5[%c0_7, %c0_8] : memref<1x128xi32, #tpu.memory_space<vmem>>, vector<1x128xi32>
    tpu.vector_store %arg5[%c0_7, %c0_8], %14 {strides = array<i32>} : memref<1x128xi32, #tpu.memory_space<vmem>>, vector<1x128xi32>,
    %16 = vector.broadcast %14 : vector<1x128xi32> to vector<128x128xi32>
    %17 = arith.cmpi eq, %8, %16 : vector<128x128xi32>
    %18 = arith.extui %17 : vector<128x128xi1> to vector<128x128xi32>
    %19 = arith.sitofp %18 : vector<128x128xi32> to vector<128x128xf32>
    %cst_9 = arith.constant dense<0.000000e+00> : vector<64x128xf32>
    %20 = tpu.matmul %1, %19, %cst_9 {dimension_numbers = #tpu.dot_dimension_numbers<[1], [0], [0], [1], [0, 0, 1, 1], [], []>} : vector<64x128xf32>, vector<128x128xf32>, vector<64x128xf32> -> vector<64x128xf32>
    %c0_10 = arith.constant 0 : index
    %c0_11 = arith.constant 0 : index
    %21 = vector.load %arg4[%c0_10, %c0_11] : memref<64x128xf32, #tpu.memory_space<vmem>>, vector<64x128xf32>
    tpu.vector_store %arg4[%c0_10, %c0_11], %20 {strides = array<i32>} : memref<64x128xf32, #tpu.memory_space<vmem>>, vector<64x128xf32>,
    %22 = arith.subf %0, %20 : vector<64x128xf32>
    %23 = arith.mulf %22, %22 : vector<64x128xf32>
    %cst_12 = arith.constant dense<0.000000e+00> : vector<128xf32>
    %24 = vector.multi_reduction <add>, %23, %cst_12 [0] : vector<64x128xf32> to vector<128xf32>
    %25 = vector.shape_cast %24 : vector<128xf32> to vector<1x128xf32>
    %c0_13 = arith.constant 0 : index
    %c0_14 = arith.constant 0 : index
    %26 = vector.load %arg6[%c0_13, %c0_14] : memref<1x128xf32, #tpu.memory_space<vmem>>, vector<1x128xf32>
    tpu.vector_store %arg6[%c0_13, %c0_14], %25 {strides = array<i32>} : memref<1x128xf32, #tpu.memory_space<vmem>>, vector<1x128xf32>,
    return
  }
  func.func @transform_0(%arg0: i32) -> (i32, i32) {
    %c0_i32 = arith.constant 0 : i32
    %c0_i32_0 = arith.constant 0 : i32
    return %c0_i32, %arg0 : i32, i32
  }
  func.func @transform_1(%arg0: i32) -> (i32, i32) {
    %c0_i32 = arith.constant 0 : i32
    %c0_i32_0 = arith.constant 0 : i32
    %c0_i32_1 = arith.constant 0 : i32
    return %c0_i32, %c0_i32_0 : i32, i32
  }
  func.func @transform_2(%arg0: i32) -> (i32, i32) {
    %c0_i32 = arith.constant 0 : i32
    %c0_i32_0 = arith.constant 0 : i32
    %c0_i32_1 = arith.constant 0 : i32
    return %c0_i32, %c0_i32_0 : i32, i32
  }
  func.func @transform_3(%arg0: i32) -> (i32, i32) {
    %c0_i32 = arith.constant 0 : i32
    %c0_i32_0 = arith.constant 0 : i32
    return %c0_i32, %arg0 : i32, i32
  }
  func.func @transform_4(%arg0: i32) -> (i32, i32) {
    %c0_i32 = arith.constant 0 : i32
    %c0_i32_0 = arith.constant 0 : i32
    return %c0_i32, %arg0 : i32, i32
  }
  func.func @transform_5(%arg0: i32) -> (i32, i32) {
    %c0_i32 = arith.constant 0 : i32
    %c0_i32_0 = arith.constant 0 : i32
    return %c0_i32, %arg0 : i32, i32
  }
}

module attributes {stable_mosaic.version = 11 : i64} {
  func.func @_vq_kernel(%arg0: i32, %arg1: memref<64x128xf32, #tpu.memory_space<vmem>>, %arg2: memref<64x128xf32, #tpu.memory_space<vmem>>, %arg3: memref<128x1xf32, #tpu.memory_space<vmem>>, %arg4: memref<64x128xf32, #tpu.memory_space<vmem>>, %arg5: memref<1x128xi32, #tpu.memory_space<vmem>>, %arg6: memref<1x128xf32, #tpu.memory_space<vmem>>) attributes {dimension_semantics = [#tpu.dimension_semantics<parallel>], iteration_bounds = array<i64: 4>, scalar_prefetch = 0 : i64, scratch_operands = 0 : i64, tpu.core_type = #tpu.core_type<tc>, window_params = [{transform_indices = @transform_0, window_bounds = array<i64: 64, 128>}, {pipeline_mode = #tpu.pipeline_mode<synchronous>, transform_indices = @transform_1, window_bounds = array<i64: 64, 128>}, {pipeline_mode = #tpu.pipeline_mode<synchronous>, transform_indices = @transform_2, window_bounds = array<i64: 128, 1>}, {transform_indices = @transform_3, window_bounds = array<i64: 64, 128>}, {transform_indices = @transform_4, window_bounds = array<i64: 1, 128>}, {transform_indices = @transform_5, window_bounds = array<i64: 1, 128>}]} {
    %c0 = arith.constant 0 : index
    %c0_0 = arith.constant 0 : index
    %0 = vector.load %arg1[%c0, %c0_0] : memref<64x128xf32, #tpu.memory_space<vmem>>, vector<64x128xf32>
    %c0_1 = arith.constant 0 : index
    %c0_2 = arith.constant 0 : index
    %1 = vector.load %arg2[%c0_1, %c0_2] : memref<64x128xf32, #tpu.memory_space<vmem>>, vector<64x128xf32>
    %cst = arith.constant dense<0.000000e+00> : vector<128x128xf32>
    %2 = tpu.matmul %1, %0, %cst {dimension_numbers = #tpu.dot_dimension_numbers<[0], [0], [1], [1], [0, 1, 1, 1], [], []>} : vector<64x128xf32>, vector<64x128xf32>, vector<128x128xf32> -> vector<128x128xf32>
    %c0_3 = arith.constant 0 : index
    %c0_4 = arith.constant 0 : index
    %3 = vector.load %arg3[%c0_3, %c0_4] : memref<128x1xf32, #tpu.memory_space<vmem>>, vector<128x1xf32>
    %4 = vector.broadcast %3 : vector<128x1xf32> to vector<128x128xf32>
    %5 = arith.subf %4, %2 : vector<128x128xf32>
    %cst_5 = arith.constant dense<0x7F800000> : vector<128xf32>
    %6 = vector.multi_reduction <minimumf>, %5, %cst_5 [0] : vector<128x128xf32> to vector<128xf32>
    %7 = vector.shape_cast %6 : vector<128xf32> to vector<1x128xf32>
    %8 = tpu.iota {dimensions = array<i32: 0>} : vector<128x128xi32>
    %9 = vector.broadcast %7 : vector<1x128xf32> to vector<128x128xf32>
    %10 = arith.cmpf oeq, %5, %9 : vector<128x128xf32>
    %c128_i32 = arith.constant 128 : i32
    %11 = vector.broadcast %c128_i32 : i32 to vector<128x128xi32>
    %12 = arith.select %10, %8, %11 : vector<128x128xi1>, vector<128x128xi32>
    %cst_6 = arith.constant dense<2147483647> : vector<128xi32>
    %13 = vector.multi_reduction <minsi>, %12, %cst_6 [0] : vector<128x128xi32> to vector<128xi32>
    %14 = vector.shape_cast %13 : vector<128xi32> to vector<1x128xi32>
    %c0_7 = arith.constant 0 : index
    %c0_8 = arith.constant 0 : index
    %15 = vector.load %arg5[%c0_7, %c0_8] : memref<1x128xi32, #tpu.memory_space<vmem>>, vector<1x128xi32>
    tpu.vector_store %arg5[%c0_7, %c0_8], %14 {strides = array<i32>} : memref<1x128xi32, #tpu.memory_space<vmem>>, vector<1x128xi32>,
    %16 = vector.broadcast %14 : vector<1x128xi32> to vector<128x128xi32>
    %17 = arith.cmpi eq, %8, %16 : vector<128x128xi32>
    %18 = arith.extui %17 : vector<128x128xi1> to vector<128x128xi32>
    %19 = arith.sitofp %18 : vector<128x128xi32> to vector<128x128xf32>
    %cst_9 = arith.constant dense<0.000000e+00> : vector<64x128xf32>
    %20 = tpu.matmul %1, %19, %cst_9 {dimension_numbers = #tpu.dot_dimension_numbers<[1], [0], [0], [1], [0, 0, 1, 1], [], []>} : vector<64x128xf32>, vector<128x128xf32>, vector<64x128xf32> -> vector<64x128xf32>
    %c0_10 = arith.constant 0 : index
    %c0_11 = arith.constant 0 : index
    %21 = vector.load %arg4[%c0_10, %c0_11] : memref<64x128xf32, #tpu.memory_space<vmem>>, vector<64x128xf32>
    tpu.vector_store %arg4[%c0_10, %c0_11], %20 {strides = array<i32>} : memref<64x128xf32, #tpu.memory_space<vmem>>, vector<64x128xf32>,
    %22 = arith.subf %0, %20 : vector<64x128xf32>
    %23 = arith.mulf %22, %22 : vector<64x128xf32>
    %cst_12 = arith.constant dense<0.000000e+00> : vector<128xf32>
    %24 = vector.multi_reduction <add>, %23, %cst_12 [0] : vector<64x128xf32> to vector<128xf32>
    %25 = vector.shape_cast %24 : vector<128xf32> to vector<1x128xf32>
    %c0_13 = arith.constant 0 : index
    %c0_14 = arith.constant 0 : index
    %26 = vector.load %arg6[%c0_13, %c0_14] : memref<1x128xf32, #tpu.memory_space<vmem>>, vector<1x128xf32>
    tpu.vector_store %arg6[%c0_13, %c0_14], %25 {strides = array<i32>} : memref<1x128xf32, #tpu.memory_space<vmem>>, vector<1x128xf32>,
    return
  }
  func.func @transform_0(%arg0: i32) -> (i32, i32) {
    %c0_i32 = arith.constant 0 : i32
    %c0_i32_0 = arith.constant 0 : i32
    return %c0_i32, %arg0 : i32, i32
  }
  func.func @transform_1(%arg0: i32) -> (i32, i32) {
    %c0_i32 = arith.constant 0 : i32
    %c0_i32_0 = arith.constant 0 : i32
    %c0_i32_1 = arith.constant 0 : i32
    return %c0_i32, %c0_i32_0 : i32, i32
  }
  func.func @transform_2(%arg0: i32) -> (i32, i32) {
    %c0_i32 = arith.constant 0 : i32
    %c0_i32_0 = arith.constant 0 : i32
    %c0_i32_1 = arith.constant 0 : i32
    return %c0_i32, %c0_i32_0 : i32, i32
  }
  func.func @transform_3(%arg0: i32) -> (i32, i32) {
    %c0_i32 = arith.constant 0 : i32
    %c0_i32_0 = arith.constant 0 : i32
    return %c0_i32, %arg0 : i32, i32
  }
  func.func @transform_4(%arg0: i32) -> (i32, i32) {
    %c0_i32 = arith.constant 0 : i32
    %c0_i32_0 = arith.constant 0 : i32
    return %c0_i32, %arg0 : i32, i32
  }
  func.func @transform_5(%arg0: i32) -> (i32, i32) {
    %c0_i32 = arith.constant 0 : i32
    %c0_i32_0 = arith.constant 0 : i32
    return %c0_i32, %arg0 : i32, i32
  }
}

</mosaic_0001>

<llo_original>
// kernel: tpu_custom_call.1
$region0: #{tpu_custom_call.1}
  #allocation0 [shape = 'u32[]', space=smem, size = 0x4, offset = 0x4, fixed_abs, tag = 'smem constant byte address 0x4 - core index']
  #allocation1 [shape = 'u32[144,128]{1,0:T(1,128)}', space=vmem, size = 0x12000, scoped, tag = 'internal scratch']
  %s0 = inlined_call_operand.hbm [shape: f32[64,512], index: 0, kind: input, shape index: {}]
  %s1 = inlined_call_operand.vmem [shape: f32[64,128], index: 1, kind: input, shape index: {}]
  %s2 = inlined_call_operand.vmem [shape: f32[128,1], index: 2, kind: input, shape index: {}]
  %s3 = inlined_call_operand.hbm [shape: f32[64,512], index: 3, kind: output, shape index: {0}]
  %s4 = inlined_call_operand.hbm [shape: s32[1,512], index: 4, kind: output, shape index: {1}]
  %s5 = inlined_call_operand.hbm [shape: f32[1,512], index: 5, kind: output, shape index: {2}]
  %6 = xla_tuple %s3, %s4, %s5
  %s7 = sld [smem:[#allocation0]]
  $region65: #{tpu_custom_call.1} parent=0
    _
  %s9 = ssub.s32 1, %s7
  %s10 = scalar_select 0, %s9, %s7
  $region1: #{tpu_custom_call.1} parent=0
    #allocation2 [shape = 'u8[65536]{0}', space=vmem, size = 0x10000, scoped, tag = 'input window, operand 0']
    #allocation3 [shape = 's32[2]{0}', space=sflag, size = 0x8, scoped, tag = 'scoped memory for tpu_custom_call.1']
    #allocation4 [shape = 's32[2]{0}', space=sflag, size = 0x8, scoped, tag = 'scoped memory for tpu_custom_call.1']
    #allocation5 [shape = 'u8[65536]{0}', space=vmem, size = 0x10000, scoped, tag = 'output window, operand 0']
    #allocation6 [shape = 'u8[1024]{0}', space=vmem, size = 0x400, scoped, tag = 'output window, operand 1']
    #allocation7 [shape = 's32[2]{0}', space=sflag, size = 0x8, scoped, tag = 'scoped memory for tpu_custom_call.1']
    #allocation8 [shape = 'u8[1024]{0}', space=vmem, size = 0x400, scoped, tag = 'output window, operand 2']
    %11 = vsyncpa [#allocation3], 0
    %s12 = scalar_lea.sflag [#allocation3], 1
    %13 = vsyncpa %s12, 0
    %14 = vsyncpa [#allocation4], 0
    %s15 = scalar_lea.sflag [#allocation4], 1
    %16 = vsyncpa %s15, 0
    %17 = vsyncpa [#allocation7], 0
    %s18 = scalar_lea.sflag [#allocation7], 1
    %19 = vsyncpa %s18, 0
    loop: start=0, step=1, limit=6
    $region2: #{tpu_custom_call.1} parent=1 // loop_pre_header
      _
    $region3: #{tpu_custom_call.1} parent=1 // loop_header
      %s21 = sphi 0, %s25
      %p22 = scmp.ge.s32.totalorder %s21, 6
      %s31 = sphi 0, %s33
      %s34 = sphi 0, %s31
      %s35 = sphi 0, %s34
      %s51 = sphi 0, %s35
      %s55 = sphi 0, %s55
      %s57 = sphi 0, %s55
      %s58 = sphi 0, %s57
      %s72 = sphi 0, %s58
      %s76 = sphi 0, %s76
      %s78 = sphi 0, %s76
      %s79 = sphi 0, %s78
      %s93 = sphi 0, %s79
      %s99 = sphi 0, %s101
      %s102 = sphi 0, %s99
      %s103 = sphi 0, %s102
      %s119 = sphi 0, %s103
      %s125 = sphi 0, %s127
      %s128 = sphi 0, %s125
      %s129 = sphi 0, %s128
      %s145 = sphi 0, %s129
      %s151 = sphi 0, %s153
      %s154 = sphi 0, %s151
      %s155 = sphi 0, %s154
      %s171 = sphi 0, %s155
    $region4: #{tpu_custom_call.1} parent=1 // loop_header_branch
      %24 = sbr.rel (%p22) target = $region8
    $region5: #{tpu_custom_call.1} parent=1 // loop_body
      %s26 = ssub.s32 %s21, 1
      %s27 = ssub.s32 %s21, 2
      %s28 = sadd.s32 %s21, 1
      %s29 = ssub.s32 %s21, %s28
      %p30 = scmp.eq.s32.totalorder %s29, 0
      %s32 = sadd.s32 %s31, 1
      %s33 = scalar_select %p30, %s31, %s32
      %p36 = pneg %p30
      %p37 = scmp.eq.s32.totalorder %s21, 3
      %p38 = por %p36, %p37
      %p39 = scmp.ne.s32.totalorder %s31, %s34
      %p40 = scmp.eq.s32.totalorder %s21, 0
      %p41 = por %p39, %p40
      %p42 = scmp.ne.s32.totalorder %s31, %s34
      %p43 = scmp.eq.s32.totalorder %s26, 3
      %p44 = por %p42, %p43
      %p45 = scmp.ne.s32.totalorder %s34, %s35
      %p46 = scmp.eq.s32.totalorder %s26, 0
      %p47 = por %p45, %p46
      %p48 = scmp.ne.s32.totalorder %s34, %s35
      %p49 = scmp.eq.s32.totalorder %s27, 3
      %p50 = por %p48, %p49
      %p52 = scmp.ne.s32.totalorder %s35, %s51
      %p53 = scmp.eq.s32.totalorder %s27, 0
      %p54 = por %p52, %p53
      %s56 = sadd.s32 %s55, 1
      %p59 = scmp.eq.s32.totalorder %s21, 3
      %p60 = scmp.ne.s32.totalorder %s55, %s57
      %p61 = scmp.eq.s32.totalorder %s21, 0
      %p62 = por %p60, %p61
      %p63 = scmp.ne.s32.totalorder %s55, %s57
      %p64 = scmp.eq.s32.totalorder %s26, 3
      %p65 = por %p63, %p64
      %p66 = scmp.ne.s32.totalorder %s57, %s58
      %p67 = scmp.eq.s32.totalorder %s26, 0
      %p68 = por %p66, %p67
      %p69 = scmp.ne.s32.totalorder %s57, %s58
      %p70 = scmp.eq.s32.totalorder %s27, 3
      %p71 = por %p69, %p70
      %p73 = scmp.ne.s32.totalorder %s58, %s72
      %p74 = scmp.eq.s32.totalorder %s27, 0
      %p75 = por %p73, %p74
      %s77 = sadd.s32 %s76, 1
      %p80 = scmp.eq.s32.totalorder %s21, 3
      %p81 = scmp.ne.s32.totalorder %s76, %s78
      %p82 = scmp.eq.s32.totalorder %s21, 0
      %p83 = por %p81, %p82
      %p84 = scmp.ne.s32.totalorder %s76, %s78
      %p85 = scmp.eq.s32.totalorder %s26, 3
      %p86 = por %p84, %p85
      %p87 = scmp.ne.s32.totalorder %s78, %s79
      %p88 = scmp.eq.s32.totalorder %s26, 0
      %p89 = por %p87, %p88
      %p90 = scmp.ne.s32.totalorder %s78, %s79
      %p91 = scmp.eq.s32.totalorder %s27, 3
      %p92 = por %p90, %p91
      %p94 = scmp.ne.s32.totalorder %s79, %s93
      %p95 = scmp.eq.s32.totalorder %s27, 0
      %p96 = por %p94, %p95
      %s97 = ssub.s32 %s21, %s28
      %p98 = scmp.eq.s32.totalorder %s97, 0
      %s100 = sadd.s32 %s99, 1
      %s101 = scalar_select %p98, %s99, %s100
      %p104 = pneg %p98
      %p105 = scmp.eq.s32.totalorder %s21, 3
      %p106 = por %p104, %p105
      %p107 = scmp.ne.s32.totalorder %s99, %s102
      %p108 = scmp.eq.s32.totalorder %s21, 0
      %p109 = por %p107, %p108
      %p110 = scmp.ne.s32.totalorder %s99, %s102
      %p111 = scmp.eq.s32.totalorder %s26, 3
      %p112 = por %p110, %p111
      %p113 = scmp.ne.s32.totalorder %s102, %s103
      %p114 = scmp.eq.s32.totalorder %s26, 0
      %p115 = por %p113, %p114
      %p116 = scmp.ne.s32.totalorder %s102, %s103
      %p117 = scmp.eq.s32.totalorder %s27, 3
      %p118 = por %p116, %p117
      %p120 = scmp.ne.s32.totalorder %s103, %s119
      %p121 = scmp.eq.s32.totalorder %s27, 0
      %p122 = por %p120, %p121
      %s123 = ssub.s32 %s21, %s28
      %p124 = scmp.eq.s32.totalorder %s123, 0
      %s126 = sadd.s32 %s125, 1
      %s127 = scalar_select %p124, %s125, %s126
      %p130 = pneg %p124
      %p131 = scmp.eq.s32.totalorder %s21, 3
      %p132 = por %p130, %p131
      %p133 = scmp.ne.s32.totalorder %s125, %s128
      %p134 = scmp.eq.s32.totalorder %s21, 0
      %p135 = por %p133, %p134
      %p136 = scmp.ne.s32.totalorder %s125, %s128
      %p137 = scmp.eq.s32.totalorder %s26, 3
      %p138 = por %p136, %p137
      %p139 = scmp.ne.s32.totalorder %s128, %s129
      %p140 = scmp.eq.s32.totalorder %s26, 0
      %p141 = por %p139, %p140
      %p142 = scmp.ne.s32.totalorder %s128, %s129
      %p143 = scmp.eq.s32.totalorder %s27, 3
      %p144 = por %p142, %p143
      %p146 = scmp.ne.s32.totalorder %s129, %s145
      %p147 = scmp.eq.s32.totalorder %s27, 0
      %p148 = por %p146, %p147
      %s149 = ssub.s32 %s21, %s28
      %p150 = scmp.eq.s32.totalorder %s149, 0
      %s152 = sadd.s32 %s151, 1
      %s153 = scalar_select %p150, %s151, %s152
      %p156 = pneg %p150
      %p157 = scmp.eq.s32.totalorder %s21, 3
      %p158 = por %p156, %p157
      %p159 = scmp.ne.s32.totalorder %s151, %s154
      %p160 = scmp.eq.s32.totalorder %s21, 0
      %p161 = por %p159, %p160
      %p162 = scmp.ne.s32.totalorder %s151, %s154
      %p163 = scmp.eq.s32.totalorder %s26, 3
      %p164 = por %p162, %p163
      %p165 = scmp.ne.s32.totalorder %s154, %s155
      %p166 = scmp.eq.s32.totalorder %s26, 0
      %p167 = por %p165, %p166
      %p168 = scmp.ne.s32.totalorder %s154, %s155
      %p169 = scmp.eq.s32.totalorder %s27, 3
      %p170 = por %p168, %p169
      %p172 = scmp.ne.s32.totalorder %s155, %s171
      %p173 = scmp.eq.s32.totalorder %s27, 0
      %p174 = por %p172, %p173
      %p175 = scmp.le.s32.totalorder 1, %s21
      %p176 = scmp.lt.s32.totalorder %s21, 5
      %p177 = pnand %p175, %p176
      %p178 = pneg %p177
      // Predicated region
      $region9: #{tpu_custom_call.1} parent=5 // pred_check
        _
      $region10: #{tpu_custom_call.1} parent=5 // pred_check_branch
        %180 = sbr.rel (%p177) target = $region12
      $region11: #{tpu_custom_call.1} parent=5 // pred_region
        %s181 = ssub.s32 %s21, 1
        // Predicated region
        $region13: #{tpu_custom_call.1} parent=11 // pred_check
          %p182 = pneg %p68
        $region14: #{tpu_custom_call.1} parent=11 // pred_check_branch
          %184 = sbr.rel (%p182) target = $region16
        $region15: #{tpu_custom_call.1} parent=11 // pred_region
          _
        $region16: #{tpu_custom_call.1} parent=11 // pred_fallthru
          _
        // Predicated region
        $region17: #{tpu_custom_call.1} parent=11 // pred_check
          %p185 = pneg %p89
        $region18: #{tpu_custom_call.1} parent=11 // pred_check_branch
          %187 = sbr.rel (%p185) target = $region20
        $region19: #{tpu_custom_call.1} parent=11 // pred_region
          _
        $region20: #{tpu_custom_call.1} parent=11 // pred_fallthru
          _
      $region12: #{tpu_custom_call.1} parent=5 // pred_fallthru
        _
      %p188 = scmp.lt.s32.totalorder %s21, 4
      // Predicated region
      $region21: #{tpu_custom_call.1} parent=5 // pred_check
        %p189 = pneg %p188
      $region22: #{tpu_custom_call.1} parent=5 // pred_check_branch
        %191 = sbr.rel (%p189) target = $region24
      $region23: #{tpu_custom_call.1} parent=5 // pred_region
        // Predicated region
        $region25: #{tpu_custom_call.1} parent=23 // pred_check
          %p192 = pneg %p41
        $region26: #{tpu_custom_call.1} parent=23 // pred_check_branch
          %194 = sbr.rel (%p192) target = $region28
        $region27: #{tpu_custom_call.1} parent=23 // pred_region
          %s195 = sand.u32 %s31, 1
          %s196 = scalar_lea.sflag [#allocation3], %s195
          %s197 = sand.u32 %s31, 1
          %s198 = smul.addr %s197, 64
          %s199 = scalar_lea.vmem [#allocation2], %s198
          %s201 = ssub.s32 1024, 1024
          %202 = vsyncadd %s196, %s201
          %s203 = smul.addr %s21, 128
          %s204 = scalar_lea.hbm %s0, %s203
          %s205 = sshll.u32 %s199, 4
          %s206 = int_to_ptr.vmem [resolvable:$true] %s205
          %211 = dma.hbm_to_vmem [thread:$0]  %s204, 1024, %s206, %s196, 512, 128, 8
        $region28: #{tpu_custom_call.1} parent=23 // pred_fallthru
          _
      $region24: #{tpu_custom_call.1} parent=5 // pred_fallthru
        _
      %p212 = scmp.le.s32.totalorder 1, %s21
      %p213 = scmp.lt.s32.totalorder %s21, 5
      %p214 = pnand %p212, %p213
      %p215 = pneg %p214
      // Predicated region
      $region29: #{tpu_custom_call.1} parent=5 // pred_check
        _
      $region30: #{tpu_custom_call.1} parent=5 // pred_check_branch
        %217 = sbr.rel (%p214) target = $region32
      $region31: #{tpu_custom_call.1} parent=5 // pred_region
        %s218 = ssub.s32 %s21, 1
        %s219 = sand.u32 %s34, 1
        %s220 = scalar_lea.sflag [#allocation3], %s219
        %s221 = sand.u32 %s34, 1
        %s222 = smul.addr %s221, 64
        %s223 = scalar_lea.vmem [#allocation2], %s222
        // Predicated region
        $region33: #{tpu_custom_call.1} parent=31 // pred_check
          %p224 = pneg %p47
        $region34: #{tpu_custom_call.1} parent=31 // pred_check_branch
          %226 = sbr.rel (%p224) target = $region36
        $region35: #{tpu_custom_call.1} parent=31 // pred_region
          %227 = dma.done %s220, 1024
        $region36: #{tpu_custom_call.1} parent=31 // pred_fallthru
          _
        %s228 = sand.u32 %s34, 1
        %s229 = scalar_lea.sflag [#allocation3], %s228
        %s230 = sand.u32 %s34, 1
        %s231 = smul.addr %s230, 64
        %s232 = scalar_lea.vmem [#allocation2], %s231
        %p233 = pneg %p47
        %p234 = pneg %p44
        %p235 = pneg %p68
        %p236 = pneg %p65
        %p237 = pneg %p89
        %p238 = pneg %p86
        %p239 = pneg %p115
        %p240 = pneg %p112
        %s241 = sand.u32 %s102, 1
        %s242 = scalar_lea.sflag [#allocation4], %s241
        %s243 = sand.u32 %s102, 1
        %s244 = smul.addr %s243, 64
        %s245 = scalar_lea.vmem [#allocation5], %s244
        %p246 = pneg %p141
        %p247 = pneg %p138
        %s248 = sand.u32 %s26, 1
        %s249 = scalar_lea.sflag [#allocation7], %s248
        %s250 = sand.u32 %s128, 1
        %s251 = scalar_lea.vmem [#allocation6], %s250
        %p252 = pneg %p167
        %p253 = pneg %p164
        %s254 = sand.u32 %s26, 1
        %s255 = scalar_lea.sflag [#allocation7], %s254
        %s256 = sand.u32 %s154, 1
        %s257 = scalar_lea.vmem [#allocation8], %s256
        %v258 = vld [vmem:[%s223] sm:$0xff]
        %v259 = vld [vmem:[%s223 + $0x8] sm:$0xff]
        %v260 = vld [vmem:[%s223 + $0x10] sm:$0xff]
        %v261 = vld [vmem:[%s223 + $0x18] sm:$0xff]
        %v262 = vld [vmem:[%s223 + $0x20] sm:$0xff]
        %v263 = vld [vmem:[%s223 + $0x28] sm:$0xff]
        %v264 = vld [vmem:[%s223 + $0x30] sm:$0xff]
        %v265 = vld [vmem:[%s223 + $0x38] sm:$0xff]
        %v266 = vld [vmem:[%s1] sm:$0xff]
        %v267 = vld [vmem:[%s1 + $0x8] sm:$0xff]
        %v268 = vld [vmem:[%s1 + $0x10] sm:$0xff]
        %v269 = vld [vmem:[%s1 + $0x18] sm:$0xff]
        %v270 = vld [vmem:[%s1 + $0x20] sm:$0xff]
        %v271 = vld [vmem:[%s1 + $0x28] sm:$0xff]
        %v272 = vld [vmem:[%s1 + $0x30] sm:$0xff]
        %v273 = vld [vmem:[%s1 + $0x38] sm:$0xff]
        %274 = vxpose.xlu0.b32.start [1/16] %v266, 128
        %275 = vxpose.xlu0.b32.cont [2/16] %v267, 128
        %276 = vxpose.xlu0.b32.cont [3/16] %v268, 128
        %277 = vxpose.xlu0.b32.cont [4/16] %v269, 128
        %278 = vxpose.xlu0.b32.cont [5/16] %v270, 128
        %279 = vxpose.xlu0.b32.cont [6/16] %v271, 128
        %280 = vxpose.xlu0.b32.cont [7/16] %v272, 128
        %281 = vxpose.xlu0.b32.cont [8/16] %v273, 128
        %282 = vxpose.xlu0.b32.cont [9/16] 0.0, 128
        %283 = vxpose.xlu0.b32.cont [10/16] 0.0, 128
        %284 = vxpose.xlu0.b32.cont [11/16] 0.0, 128
        %285 = vxpose.xlu0.b32.cont [12/16] 0.0, 128
        %286 = vxpose.xlu0.b32.cont [13/16] 0.0, 128
        %287 = vxpose.xlu0.b32.cont [14/16] 0.0, 128
        %288 = vxpose.xlu0.b32.cont [15/16] 0.0, 128
        %289 = vxpose.xlu0.b32.end [16/16] 0.0, 128
        %v290 = vpop.trf.xlu0
        %v291 = vpop.trf.xlu0
        %v292 = vpop.trf.xlu0
        %v293 = vpop.trf.xlu0
        %v294 = vpop.trf.xlu0
        %v295 = vpop.trf.xlu0
        %v296 = vpop.trf.xlu0
        %v297 = vpop.trf.xlu0
        %v298 = vpop.trf.xlu0
        %v299 = vpop.trf.xlu0
        %v300 = vpop.trf.xlu0
        %v301 = vpop.trf.xlu0
        %v302 = vpop.trf.xlu0
        %v303 = vpop.trf.xlu0
        %v304 = vpop.trf.xlu0
        %v305 = vpop.trf.xlu0
        %vm306 = vcmask 523264
        %v308 = vsel %vm306, %v290, 0
        %v311 = vsel %vm306, %v291, 0
        %v314 = vsel %vm306, %v292, 0
        %v317 = vsel %vm306, %v293, 0
        %v320 = vsel %vm306, %v294, 0
        %v323 = vsel %vm306, %v295, 0
        %v326 = vsel %vm306, %v296, 0
        %v329 = vsel %vm306, %v297, 0
        %v332 = vsel %vm306, %v298, 0
        %v335 = vsel %vm306, %v299, 0
        %v338 = vsel %vm306, %v300, 0
        %v341 = vsel %vm306, %v301, 0
        %v344 = vsel %vm306, %v302, 0
        %v347 = vsel %vm306, %v303, 0
        %v350 = vsel %vm306, %v304, 0
        %v353 = vsel %vm306, %v305, 0
        %355 = vmatprep.subr.mxu0 0.0
        %356 = vmatpush1.msra.mxu0 0.0
        %357 = vmatprep.subr.mxu0 0.0
        %358 = vmatpush1.msra.mxu0 0.0
        %359 = vmatprep.subr.mxu0 0.0
        %360 = vmatpush1.msra.mxu0 0.0
        %361 = vmatprep.subr.mxu0 0.0
        %362 = vmatpush1.msra.mxu0 0.0
        %363 = vmatprep.subr.mxu0 0.0
        %364 = vmatpush1.msra.mxu0 0.0
        %365 = vmatprep.subr.mxu0 0.0
        %366 = vmatpush1.msra.mxu0 0.0
        %367 = vmatprep.subr.mxu0 0.0
        %368 = vmatpush1.msra.mxu0 0.0
        %369 = vmatprep.subr.mxu0 0.0
        %370 = vmatpush1.msra.mxu0 0.0
        %371 = vmatprep.subr.mxu0 0.0
        %372 = vmatpush1.msra.mxu0 %v265
        %373 = vmatprep.subr.mxu0 0.0
        %374 = vmatpush1.msra.mxu0 %v264
        %375 = vmatprep.subr.mxu0 0.0
        %376 = vmatpush1.msra.mxu0 %v263
        %377 = vmatprep.subr.mxu0 0.0
        %378 = vmatpush1.msra.mxu0 %v262
        %379 = vmatprep.subr.mxu0 0.0
        %380 = vmatpush1.msra.mxu0 %v261
        %381 = vmatprep.subr.mxu0 0.0
        %382 = vmatpush1.msra.mxu0 %v260
        %383 = vmatprep.subr.mxu0 0.0
        %384 = vmatpush1.msra.mxu0 %v259
        %385 = vmatprep.subr.mxu0 0.0
        %386 = vmatpush1.msra.mxu0 %v258
        %387 = vmatprep.subr.mxu0 0.0
        %388 = vmatpush2.msra.mxu0 0.0
        %389 = vmatprep.subr.mxu0 0.0
        %390 = vmatpush2.msra.mxu0 0.0
        %391 = vmatprep.subr.mxu0 0.0
        %392 = vmatpush2.msra.mxu0 0.0
        %393 = vmatprep.subr.mxu0 0.0
        %394 = vmatpush2.msra.mxu0 0.0
        %395 = vmatprep.subr.mxu0 0.0
        %396 = vmatpush2.msra.mxu0 0.0
        %397 = vmatprep.subr.mxu0 0.0
        %398 = vmatpush2.msra.mxu0 0.0
        %399 = vmatprep.subr.mxu0 0.0
        %400 = vmatpush2.msra.mxu0 0.0
        %401 = vmatprep.subr.mxu0 0.0
        %402 = vmatpush2.msra.mxu0 0.0
        %403 = vmatprep.subr.mxu0 0.0
        %404 = vmatpush2.msra.mxu0 0.0
        %405 = vmatprep.subr.mxu0 0.0
        %406 = vmatpush2.msra.mxu0 0.0
        %407 = vmatprep.subr.mxu0 0.0
        %408 = vmatpush2.msra.mxu0 0.0
        %409 = vmatprep.subr.mxu0 0.0
        %410 = vmatpush2.msra.mxu0 0.0
        %411 = vmatprep.subr.mxu0 0.0
        %412 = vmatpush2.msra.mxu0 0.0
        %413 = vmatprep.subr.mxu0 0.0
        %414 = vmatpush2.msra.mxu0 0.0
        %415 = vmatprep.subr.mxu0 0.0
        %416 = vmatpush2.msra.mxu0 0.0
        %417 = vmatprep.subr.mxu0 0.0
        %418 = vmatpush2.msra.mxu0 0.0
        %419 = vmatprep.mubr.f32.mxu0 0.0
        %420 = vmatmul.mubr.f32.gmra.mxu0 %v308
        %v421 = vpop.f32.mrf.mxu0
        %v422 = vadd.f32 0.0, %v421
        %v423 = vpop.f32.mrf.mxu0
        %424 = vmatprep.mubr.f32.mxu0 0.0
        %425 = vmatmul.mubr.f32.gmra.mxu0 %v311
        %v426 = vpop.f32.mrf.mxu0
        %v427 = vadd.f32 0.0, %v426
        %v428 = vpop.f32.mrf.mxu0
        %429 = vmatprep.mubr.f32.mxu0 0.0
        %430 = vmatmul.mubr.f32.gmra.mxu0 %v314
        %v431 = vpop.f32.mrf.mxu0
        %v432 = vadd.f32 0.0, %v431
        %v433 = vpop.f32.mrf.mxu0
        %434 = vmatprep.mubr.f32.mxu0 0.0
        %435 = vmatmul.mubr.f32.gmra.mxu0 %v317
        %v436 = vpop.f32.mrf.mxu0
        %v437 = vadd.f32 0.0, %v436
        %v438 = vpop.f32.mrf.mxu0
        %439 = vmatprep.mubr.f32.mxu0 0.0
        %440 = vmatmul.mubr.f32.gmra.mxu0 %v320
        %v441 = vpop.f32.mrf.mxu0
        %v442 = vadd.f32 0.0, %v441
        %v443 = vpop.f32.mrf.mxu0
        %444 = vmatprep.mubr.f32.mxu0 0.0
        %445 = vmatmul.mubr.f32.gmra.mxu0 %v323
        %v446 = vpop.f32.mrf.mxu0
        %v447 = vadd.f32 0.0, %v446
        %v448 = vpop.f32.mrf.mxu0
        %449 = vmatprep.mubr.f32.mxu0 0.0
        %450 = vmatmul.mubr.f32.gmra.mxu0 %v326
        %v451 = vpop.f32.mrf.mxu0
        %v452 = vadd.f32 0.0, %v451
        %v453 = vpop.f32.mrf.mxu0
        %454 = vmatprep.mubr.f32.mxu0 0.0
        %455 = vmatmul.mubr.f32.gmra.mxu0 %v329
        %v456 = vpop.f32.mrf.mxu0
        %v457 = vadd.f32 0.0, %v456
        %v458 = vpop.f32.mrf.mxu0
        %459 = vmatprep.mubr.f32.mxu0 0.0
        %460 = vmatmul.mubr.f32.gmra.mxu0 %v332
        %v461 = vpop.f32.mrf.mxu0
        %v462 = vadd.f32 0.0, %v461
        %v463 = vpop.f32.mrf.mxu0
        %464 = vmatprep.mubr.f32.mxu0 0.0
        %465 = vmatmul.mubr.f32.gmra.mxu0 %v335
        %v466 = vpop.f32.mrf.mxu0
        %v467 = vadd.f32 0.0, %v466
        %v468 = vpop.f32.mrf.mxu0
        %469 = vmatprep.mubr.f32.mxu0 0.0
        %470 = vmatmul.mubr.f32.gmra.mxu0 %v338
        %v471 = vpop.f32.mrf.mxu0
        %v472 = vadd.f32 0.0, %v471
        %v473 = vpop.f32.mrf.mxu0
        %474 = vmatprep.mubr.f32.mxu0 0.0
        %475 = vmatmul.mubr.f32.gmra.mxu0 %v341
        %v476 = vpop.f32.mrf.mxu0
        %v477 = vadd.f32 0.0, %v476
        %v478 = vpop.f32.mrf.mxu0
        %479 = vmatprep.mubr.f32.mxu0 0.0
        %480 = vmatmul.mubr.f32.gmra.mxu0 %v344
        %v481 = vpop.f32.mrf.mxu0
        %v482 = vadd.f32 0.0, %v481
        %v483 = vpop.f32.mrf.mxu0
        %484 = vmatprep.mubr.f32.mxu0 0.0
        %485 = vmatmul.mubr.f32.gmra.mxu0 %v347
        %v486 = vpop.f32.mrf.mxu0
        %v487 = vadd.f32 0.0, %v486
        %v488 = vpop.f32.mrf.mxu0
        %489 = vmatprep.mubr.f32.mxu0 0.0
        %490 = vmatmul.mubr.f32.gmra.mxu0 %v350
        %v491 = vpop.f32.mrf.mxu0
        %v492 = vadd.f32 0.0, %v491
        %v493 = vpop.f32.mrf.mxu0
        %494 = vmatprep.mubr.f32.mxu0 0.0
        %495 = vmatmul.mubr.f32.gmra.mxu0 %v353
        %v496 = vpop.f32.mrf.mxu0
        %v497 = vadd.f32 0.0, %v496
        %v498 = vpop.f32.mrf.mxu0
        %499 = vdwg.mxu0
        %v500 = vld [vmem:[%s2] sm:$0xff]
        %v501 = vld [vmem:[%s2 + $0x8] sm:$0xff]
        %v502 = vld [vmem:[%s2 + $0x10] sm:$0xff]
        %v503 = vld [vmem:[%s2 + $0x18] sm:$0xff]
        %v504 = vld [vmem:[%s2 + $0x20] sm:$0xff]
        %v505 = vld [vmem:[%s2 + $0x28] sm:$0xff]
        %v506 = vld [vmem:[%s2 + $0x30] sm:$0xff]
        %v507 = vld [vmem:[%s2 + $0x38] sm:$0xff]
        %v508 = vld [vmem:[%s2 + $0x40] sm:$0xff]
        %v509 = vld [vmem:[%s2 + $0x48] sm:$0xff]
        %v510 = vld [vmem:[%s2 + $0x50] sm:$0xff]
        %v511 = vld [vmem:[%s2 + $0x58] sm:$0xff]
        %v512 = vld [vmem:[%s2 + $0x60] sm:$0xff]
        %v513 = vld [vmem:[%s2 + $0x68] sm:$0xff]
        %v514 = vld [vmem:[%s2 + $0x70] sm:$0xff]
        %v515 = vld [vmem:[%s2 + $0x78] sm:$0xff]
        %517 = vset.pattern.permute.xlu0 0
        %518 = vperm.xlu0 %517, %v500
        %v519 = vpop.permute.xlu0 %518
        %522 = vset.pattern.permute.xlu0 0
        %523 = vperm.xlu0 %522, %v501
        %v524 = vpop.permute.xlu0 %523
        %527 = vset.pattern.permute.xlu0 0
        %528 = vperm.xlu0 %527, %v502
        %v529 = vpop.permute.xlu0 %528
        %532 = vset.pattern.permute.xlu0 0
        %533 = vperm.xlu0 %532, %v503
        %v534 = vpop.permute.xlu0 %533
        %537 = vset.pattern.permute.xlu0 0
        %538 = vperm.xlu0 %537, %v504
        %v539 = vpop.permute.xlu0 %538
        %542 = vset.pattern.permute.xlu0 0
        %543 = vperm.xlu0 %542, %v505
        %v544 = vpop.permute.xlu0 %543
        %547 = vset.pattern.permute.xlu0 0
        %548 = vperm.xlu0 %547, %v506
        %v549 = vpop.permute.xlu0 %548
        %552 = vset.pattern.permute.xlu0 0
        %553 = vperm.xlu0 %552, %v507
        %v554 = vpop.permute.xlu0 %553
        %557 = vset.pattern.permute.xlu0 0
        %558 = vperm.xlu0 %557, %v508
        %v559 = vpop.permute.xlu0 %558
        %562 = vset.pattern.permute.xlu0 0
        %563 = vperm.xlu0 %562, %v509
        %v564 = vpop.permute.xlu0 %563
        %567 = vset.pattern.permute.xlu0 0
        %568 = vperm.xlu0 %567, %v510
        %v569 = vpop.permute.xlu0 %568
        %572 = vset.pattern.permute.xlu0 0
        %573 = vperm.xlu0 %572, %v511
        %v574 = vpop.permute.xlu0 %573
        %577 = vset.pattern.permute.xlu0 0
        %578 = vperm.xlu0 %577, %v512
        %v579 = vpop.permute.xlu0 %578
        %582 = vset.pattern.permute.xlu0 0
        %583 = vperm.xlu0 %582, %v513
        %v584 = vpop.permute.xlu0 %583
        %587 = vset.pattern.permute.xlu0 0
        %588 = vperm.xlu0 %587, %v514
        %v589 = vpop.permute.xlu0 %588
        %592 = vset.pattern.permute.xlu0 0
        %593 = vperm.xlu0 %592, %v515
        %v594 = vpop.permute.xlu0 %593
        %v596 = vsub.f32 %v519, %v422
        %v597 = vsub.f32 %v524, %v427
        %v598 = vsub.f32 %v529, %v432
        %v599 = vsub.f32 %v534, %v437
        %v600 = vsub.f32 %v539, %v442
        %v601 = vsub.f32 %v544, %v447
        %v602 = vsub.f32 %v549, %v452
        %v603 = vsub.f32 %v554, %v457
        %v604 = vsub.f32 %v559, %v462
        %v605 = vsub.f32 %v564, %v467
        %v606 = vsub.f32 %v569, %v472
        %v607 = vsub.f32 %v574, %v477
        %v608 = vsub.f32 %v579, %v482
        %v609 = vsub.f32 %v584, %v487
        %v610 = vsub.f32 %v589, %v492
        %v611 = vsub.f32 %v594, %v497
        %v612 = vmin.f32 %v596, %v600
        %v613 = vmin.f32 %v597, %v601
        %v614 = vmin.f32 %v598, %v602
        %v615 = vmin.f32 %v599, %v603
        %v616 = vmin.f32 %v612, %v604
        %v617 = vmin.f32 %v613, %v605
        %v618 = vmin.f32 %v614, %v606
        %v619 = vmin.f32 %v615, %v607
        %v620 = vmin.f32 %v616, %v608
        %v621 = vmin.f32 %v617, %v609
        %v622 = vmin.f32 %v618, %v610
        %v623 = vmin.f32 %v619, %v611
        %v624 = vmin.f32 %v620, %v621
        %v625 = vmin.f32 %v622, %v623
        %v626 = vmin.f32 %v624, %v625
        %v627 = vrot.slane %v626, 4
        %v628 = vmin.f32 %v626, %v627
        %v629 = vrot.slane %v628, 2
        %v630 = vmin.f32 %v628, %v629
        %v631 = vrot.slane %v630, 1
        %v632 = vmin.f32 %v630, %v631
        %v633 = vlaneseq
        %v634 = vshrl.u32 %v633, 7
        %v635 = vadd.s32 %v634, 8
        %v636 = vadd.s32 %v634, 16
        %v637 = vadd.s32 %v634, 24
        %v638 = vadd.s32 %v634, 32
        %v639 = vadd.s32 %v634, 40
        %v640 = vadd.s32 %v634, 48
        %v641 = vadd.s32 %v634, 56
        %v642 = vadd.s32 %v634, 64
        %v643 = vadd.s32 %v634, 72
        %v644 = vadd.s32 %v634, 80
        %v645 = vadd.s32 %v634, 88
        %v646 = vadd.s32 %v634, 96
        %v647 = vadd.s32 %v634, 104
        %v648 = vadd.s32 %v634, 112
        %v649 = vadd.s32 %v634, 120
        %vm650 = vcmp.eq.f32.partialorder %v596, %v632
        %vm651 = vcmp.eq.f32.partialorder %v597, %v632
        %vm652 = vcmp.eq.f32.partialorder %v598, %v632
        %vm653 = vcmp.eq.f32.partialorder %v599, %v632
        %vm654 = vcmp.eq.f32.partialorder %v600, %v632
        %vm655 = vcmp.eq.f32.partialorder %v601, %v632
        %vm656 = vcmp.eq.f32.partialorder %v602, %v632
        %vm657 = vcmp.eq.f32.partialorder %v603, %v632
        %vm658 = vcmp.eq.f32.partialorder %v604, %v632
        %vm659 = vcmp.eq.f32.partialorder %v605, %v632
        %vm660 = vcmp.eq.f32.partialorder %v606, %v632
        %vm661 = vcmp.eq.f32.partialorder %v607, %v632
        %vm662 = vcmp.eq.f32.partialorder %v608, %v632
        %vm663 = vcmp.eq.f32.partialorder %v609, %v632
        %vm664 = vcmp.eq.f32.partialorder %v610, %v632
        %vm665 = vcmp.eq.f32.partialorder %v611, %v632
        %v666 = vsel %vm650, %v634, 128
        %v667 = vsel %vm651, %v635, 128
        %v668 = vsel %vm652, %v636, 128
        %v669 = vsel %vm653, %v637, 128
        %v670 = vsel %vm654, %v638, 128
        %v671 = vsel %vm655, %v639, 128
        %v672 = vsel %vm656, %v640, 128
        %v673 = vsel %vm657, %v641, 128
        %v674 = vsel %vm658, %v642, 128
        %v675 = vsel %vm659, %v643, 128
        %v676 = vsel %vm660, %v644, 128
        %v677 = vsel %vm661, %v645, 128
        %v678 = vsel %vm662, %v646, 128
        %v679 = vsel %vm663, %v647, 128
        %v680 = vsel %vm664, %v648, 128
        %v681 = vsel %vm665, %v649, 128
        %vm682 = vcmp.lt.s32.totalorder %v666, %v670
        %v683 = vsel %vm682, %v666, %v670
        %vm684 = vcmp.lt.s32.totalorder %v667, %v671
        %v685 = vsel %vm684, %v667, %v671
        %vm686 = vcmp.lt.s32.totalorder %v668, %v672
        %v687 = vsel %vm686, %v668, %v672
        %vm688 = vcmp.lt.s32.totalorder %v669, %v673
        %v689 = vsel %vm688, %v669, %v673
        %vm690 = vcmp.lt.s32.totalorder %v683, %v674
        %v691 = vsel %vm690, %v683, %v674
        %vm692 = vcmp.lt.s32.totalorder %v685, %v675
        %v693 = vsel %vm692, %v685, %v675
        %vm694 = vcmp.lt.s32.totalorder %v687, %v676
        %v695 = vsel %vm694, %v687, %v676
        %vm696 = vcmp.lt.s32.totalorder %v689, %v677
        %v697 = vsel %vm696, %v689, %v677
        %vm698 = vcmp.lt.s32.totalorder %v691, %v678
        %v699 = vsel %vm698, %v691, %v678
        %vm700 = vcmp.lt.s32.totalorder %v693, %v679
        %v701 = vsel %vm700, %v693, %v679
        %vm702 = vcmp.lt.s32.totalorder %v695, %v680
        %v703 = vsel %vm702, %v695, %v680
        %vm704 = vcmp.lt.s32.totalorder %v697, %v681
        %v705 = vsel %vm704, %v697, %v681
        %vm706 = vcmp.lt.s32.totalorder %v699, %v701
        %v707 = vsel %vm706, %v699, %v701
        %vm708 = vcmp.lt.s32.totalorder %v703, %v705
        %v709 = vsel %vm708, %v703, %v705
        %vm710 = vcmp.lt.s32.totalorder %v707, %v709
        %v711 = vsel %vm710, %v707, %v709
        %v712 = vrot.slane %v711, 4
        %vm713 = vcmp.lt.s32.totalorder %v711, %v712
        %v714 = vsel %vm713, %v711, %v712
        %v715 = vrot.slane %v714, 2
        %vm716 = vcmp.lt.s32.totalorder %v714, %v715
        %v717 = vsel %vm716, %v714, %v715
        %v718 = vrot.slane %v717, 1
        %vm719 = vcmp.lt.s32.totalorder %v717, %v718
        %v720 = vsel %vm719, %v717, %v718
        %721 = vst [vmem:[%s251] sm:$0x1] %v720
        %vm722 = vcmp.eq.s32.totalorder %v634, %v720
        %vm723 = vcmp.eq.s32.totalorder %v635, %v720
        %vm724 = vcmp.eq.s32.totalorder %v636, %v720
        %vm725 = vcmp.eq.s32.totalorder %v637, %v720
        %vm726 = vcmp.eq.s32.totalorder %v638, %v720
        %vm727 = vcmp.eq.s32.totalorder %v639, %v720
        %vm728 = vcmp.eq.s32.totalorder %v640, %v720
        %vm729 = vcmp.eq.s32.totalorder %v641, %v720
        %vm730 = vcmp.eq.s32.totalorder %v642, %v720
        %vm731 = vcmp.eq.s32.totalorder %v643, %v720
        %vm732 = vcmp.eq.s32.totalorder %v644, %v720
        %vm733 = vcmp.eq.s32.totalorder %v645, %v720
        %vm734 = vcmp.eq.s32.totalorder %v646, %v720
        %vm735 = vcmp.eq.s32.totalorder %v647, %v720
        %vm736 = vcmp.eq.s32.totalorder %v648, %v720
        %vm737 = vcmp.eq.s32.totalorder %v649, %v720
        %v738 = vsel %vm722, 1, 0
        %v739 = vsel %vm723, 1, 0
        %v740 = vsel %vm724, 1, 0
        %v741 = vsel %vm725, 1, 0
        %v742 = vsel %vm726, 1, 0
        %v743 = vsel %vm727, 1, 0
        %v744 = vsel %vm728, 1, 0
        %v745 = vsel %vm729, 1, 0
        %v746 = vsel %vm730, 1, 0
        %v747 = vsel %vm731, 1, 0
        %v748 = vsel %vm732, 1, 0
        %v749 = vsel %vm733, 1, 0
        %v750 = vsel %vm734, 1, 0
        %v751 = vsel %vm735, 1, 0
        %v752 = vsel %vm736, 1, 0
        %v753 = vsel %vm737, 1, 0
        %v754 = vcvt.s32.f32 %v738
        %v755 = vcvt.s32.f32 %v739
        %v756 = vcvt.s32.f32 %v740
        %v757 = vcvt.s32.f32 %v741
        %v758 = vcvt.s32.f32 %v742
        %v759 = vcvt.s32.f32 %v743
        %v760 = vcvt.s32.f32 %v744
        %v761 = vcvt.s32.f32 %v745
        %v762 = vcvt.s32.f32 %v746
        %v763 = vcvt.s32.f32 %v747
        %v764 = vcvt.s32.f32 %v748
        %v765 = vcvt.s32.f32 %v749
        %v766 = vcvt.s32.f32 %v750
        %v767 = vcvt.s32.f32 %v751
        %v768 = vcvt.s32.f32 %v752
        %v769 = vcvt.s32.f32 %v753
        %770 = vmatprep.subr.mxu0 0.0
        %771 = vmatpush1.msra.mxu0 %v769
        %772 = vmatprep.subr.mxu0 0.0
        %773 = vmatpush1.msra.mxu0 %v768
        %774 = vmatprep.subr.mxu0 0.0
        %775 = vmatpush1.msra.mxu0 %v767
        %776 = vmatprep.subr.mxu0 0.0
        %777 = vmatpush1.msra.mxu0 %v766
        %778 = vmatprep.subr.mxu0 0.0
        %779 = vmatpush1.msra.mxu0 %v765
        %780 = vmatprep.subr.mxu0 0.0
        %781 = vmatpush1.msra.mxu0 %v764
        %782 = vmatprep.subr.mxu0 0.0
        %783 = vmatpush1.msra.mxu0 %v763
        %784 = vmatprep.subr.mxu0 0.0
        %785 = vmatpush1.msra.mxu0 %v762
        %786 = vmatprep.subr.mxu0 0.0
        %787 = vmatpush1.msra.mxu0 %v761
        %788 = vmatprep.subr.mxu0 0.0
        %789 = vmatpush1.msra.mxu0 %v760
        %790 = vmatprep.subr.mxu0 0.0
        %791 = vmatpush1.msra.mxu0 %v759
        %792 = vmatprep.subr.mxu0 0.0
        %793 = vmatpush1.msra.mxu0 %v758
        %794 = vmatprep.subr.mxu0 0.0
        %795 = vmatpush1.msra.mxu0 %v757
        %796 = vmatprep.subr.mxu0 0.0
        %797 = vmatpush1.msra.mxu0 %v756
        %798 = vmatprep.subr.mxu0 0.0
        %799 = vmatpush1.msra.mxu0 %v755
        %800 = vmatprep.subr.mxu0 0.0
        %801 = vmatpush1.msra.mxu0 %v754
        %802 = vmatprep.subr.mxu0 0.0
        %803 = vmatpush2.msra.mxu0 0.0
        %804 = vmatprep.subr.mxu0 0.0
        %805 = vmatpush2.msra.mxu0 0.0
        %806 = vmatprep.subr.mxu0 0.0
        %807 = vmatpush2.msra.mxu0 0.0
        %808 = vmatprep.subr.mxu0 0.0
        %809 = vmatpush2.msra.mxu0 0.0
        %810 = vmatprep.subr.mxu0 0.0
        %811 = vmatpush2.msra.mxu0 0.0
        %812 = vmatprep.subr.mxu0 0.0
        %813 = vmatpush2.msra.mxu0 0.0
        %814 = vmatprep.subr.mxu0 0.0
        %815 = vmatpush2.msra.mxu0 0.0
        %816 = vmatprep.subr.mxu0 0.0
        %817 = vmatpush2.msra.mxu0 0.0
        %818 = vmatprep.subr.mxu0 0.0
        %819 = vmatpush2.msra.mxu0 0.0
        %820 = vmatprep.subr.mxu0 0.0
        %821 = vmatpush2.msra.mxu0 0.0
        %822 = vmatprep.subr.mxu0 0.0
        %823 = vmatpush2.msra.mxu0 0.0
        %824 = vmatprep.subr.mxu0 0.0
        %825 = vmatpush2.msra.mxu0 0.0
        %826 = vmatprep.subr.mxu0 0.0
        %827 = vmatpush2.msra.mxu0 0.0
        %828 = vmatprep.subr.mxu0 0.0
        %829 = vmatpush2.msra.mxu0 0.0
        %830 = vmatprep.subr.mxu0 0.0
        %831 = vmatpush2.msra.mxu0 0.0
        %832 = vmatprep.subr.mxu0 0.0
        %833 = vmatpush2.msra.mxu0 0.0
        %834 = vmatprep.mubr.f32.mxu0 0.0
        %835 = vmatmul.mubr.f32.gmra.mxu0 %v266
        %v836 = vpop.f32.mrf.mxu0
        %v837 = vadd.f32 0.0, %v836
        %v838 = vpop.f32.mrf.mxu0
        %839 = vmatprep.mubr.f32.mxu0 0.0
        %840 = vmatmul.mubr.f32.gmra.mxu0 %v267
        %v841 = vpop.f32.mrf.mxu0
        %v842 = vadd.f32 0.0, %v841
        %v843 = vpop.f32.mrf.mxu0
        %844 = vmatprep.mubr.f32.mxu0 0.0
        %845 = vmatmul.mubr.f32.gmra.mxu0 %v268
        %v846 = vpop.f32.mrf.mxu0
        %v847 = vadd.f32 0.0, %v846
        %v848 = vpop.f32.mrf.mxu0
        %849 = vmatprep.mubr.f32.mxu0 0.0
        %850 = vmatmul.mubr.f32.gmra.mxu0 %v269
        %v851 = vpop.f32.mrf.mxu0
        %v852 = vadd.f32 0.0, %v851
        %v853 = vpop.f32.mrf.mxu0
        %854 = vmatprep.mubr.f32.mxu0 0.0
        %855 = vmatmul.mubr.f32.gmra.mxu0 %v270
        %v856 = vpop.f32.mrf.mxu0
        %v857 = vadd.f32 0.0, %v856
        %v858 = vpop.f32.mrf.mxu0
        %859 = vmatprep.mubr.f32.mxu0 0.0
        %860 = vmatmul.mubr.f32.gmra.mxu0 %v271
        %v861 = vpop.f32.mrf.mxu0
        %v862 = vadd.f32 0.0, %v861
        %v863 = vpop.f32.mrf.mxu0
        %864 = vmatprep.mubr.f32.mxu0 0.0
        %865 = vmatmul.mubr.f32.gmra.mxu0 %v272
        %v866 = vpop.f32.mrf.mxu0
        %v867 = vadd.f32 0.0, %v866
        %v868 = vpop.f32.mrf.mxu0
        %869 = vmatprep.mubr.f32.mxu0 0.0
        %870 = vmatmul.mubr.f32.gmra.mxu0 %v273
        %v871 = vpop.f32.mrf.mxu0
        %v872 = vadd.f32 0.0, %v871
        %v873 = vpop.f32.mrf.mxu0
        %874 = vdwg.mxu0
        %875 = vst [vmem:[%s245] sm:$0xff] %v837
        %876 = vst [vmem:[%s245 + $0x8] sm:$0xff] %v842
        %877 = vst [vmem:[%s245 + $0x10] sm:$0xff] %v847
        %878 = vst [vmem:[%s245 + $0x18] sm:$0xff] %v852
        %879 = vst [vmem:[%s245 + $0x20] sm:$0xff] %v857
        %880 = vst [vmem:[%s245 + $0x28] sm:$0xff] %v862
        %881 = vst [vmem:[%s245 + $0x30] sm:$0xff] %v867
        %882 = vst [vmem:[%s245 + $0x38] sm:$0xff] %v872
        %v883 = vsub.f32 %v258, %v837
        %v884 = vsub.f32 %v259, %v842
        %v885 = vsub.f32 %v260, %v847
        %v886 = vsub.f32 %v261, %v852
        %v887 = vsub.f32 %v262, %v857
        %v888 = vsub.f32 %v263, %v862
        %v889 = vsub.f32 %v264, %v867
        %v890 = vsub.f32 %v265, %v872
        %v891 = vmul.f32 %v883, %v883
        %v892 = vmul.f32 %v884, %v884
        %v893 = vmul.f32 %v885, %v885
        %v894 = vmul.f32 %v886, %v886
        %v895 = vmul.f32 %v887, %v887
        %v896 = vmul.f32 %v888, %v888
        %v897 = vmul.f32 %v889, %v889
        %v898 = vmul.f32 %v890, %v890
        %v899 = vadd.f32 %v891, %v892
        %v900 = vadd.f32 %v899, %v893
        %v901 = vadd.f32 %v900, %v894
        %v902 = vadd.f32 %v901, %v895
        %v903 = vadd.f32 %v902, %v896
        %v904 = vadd.f32 %v903, %v897
        %v905 = vadd.f32 %v904, %v898
        %v906 = vrot.slane %v905, 4
        %v907 = vadd.f32 %v905, %v906
        %v908 = vrot.slane %v907, 2
        %v909 = vadd.f32 %v907, %v908
        %v910 = vrot.slane %v909, 1
        %v911 = vadd.f32 %v909, %v910
        %912 = vst [vmem:[%s257] sm:$0x1] %v911
        %s913 = sand.u32 %s102, 1
        %s914 = scalar_lea.sflag [#allocation4], %s913
        %s915 = sand.u32 %s102, 1
        %s916 = smul.addr %s915, 64
        %s917 = scalar_lea.vmem [#allocation5], %s916
        %s918 = sand.u32 %s26, 1
        %s919 = scalar_lea.sflag [#allocation7], %s918
        %s920 = sand.u32 %s128, 1
        %s921 = scalar_lea.vmem [#allocation6], %s920
        %s922 = sand.u32 %s26, 1
        %s923 = scalar_lea.sflag [#allocation7], %s922
        %s924 = sand.u32 %s154, 1
        %s925 = scalar_lea.vmem [#allocation8], %s924
        // Predicated region
        $region37: #{tpu_custom_call.1} parent=31 // pred_check
          %p926 = pneg %p112
        $region38: #{tpu_custom_call.1} parent=31 // pred_check_branch
          %928 = sbr.rel (%p926) target = $region40
        $region39: #{tpu_custom_call.1} parent=31 // pred_region
          %s930 = ssub.s32 1024, 1024
          %931 = vsyncadd %s914, %s930
          %s932 = smul.addr %s26, 128
          %s933 = scalar_lea.hbm %s3, %s932
          %s934 = sshll.u32 %s917, 4
          %s935 = int_to_ptr.vmem [resolvable:$true] %s934
          %940 = dma.vmem_to_hbm [thread:$0]  %s935, 1024, %s933, %s914, 128, 512, 8
        $region40: #{tpu_custom_call.1} parent=31 // pred_fallthru
          _
        // Predicated region
        $region41: #{tpu_custom_call.1} parent=31 // pred_check
          %p941 = pneg %p138
        $region42: #{tpu_custom_call.1} parent=31 // pred_check_branch
          %943 = sbr.rel (%p941) target = $region44
        $region43: #{tpu_custom_call.1} parent=31 // pred_region
          %s945 = ssub.s32 16, 16
          %946 = vsyncadd %s919, %s945
          %s947 = smul.addr %s26, 16
          %s948 = scalar_lea.hbm %s4, %s947
          %s950 = sshll.u32 %s921, 4
          %s951 = int_to_ptr.vmem [resolvable:$true] %s950
          %953 = dma.vmem_to_hbm [thread:$0]  %s951, 16, %s948, %s919
        $region44: #{tpu_custom_call.1} parent=31 // pred_fallthru
          _
        // Predicated region
        $region45: #{tpu_custom_call.1} parent=31 // pred_check
          %p954 = pneg %p164
        $region46: #{tpu_custom_call.1} parent=31 // pred_check_branch
          %956 = sbr.rel (%p954) target = $region48
        $region47: #{tpu_custom_call.1} parent=31 // pred_region
          %s958 = ssub.s32 16, 16
          %959 = vsyncadd %s923, %s958
          %s960 = smul.addr %s26, 16
          %s961 = scalar_lea.hbm %s5, %s960
          %s963 = sshll.u32 %s925, 4
          %s964 = int_to_ptr.vmem [resolvable:$true] %s963
          %966 = dma.vmem_to_hbm [thread:$0]  %s964, 16, %s961, %s923
        $region48: #{tpu_custom_call.1} parent=31 // pred_fallthru
          _
      $region32: #{tpu_custom_call.1} parent=5 // pred_fallthru
        _
      %p967 = scmp.le.s32.totalorder 2, %s21
      // Predicated region
      $region49: #{tpu_custom_call.1} parent=5 // pred_check
        %p968 = pneg %p967
      $region50: #{tpu_custom_call.1} parent=5 // pred_check_branch
        %970 = sbr.rel (%p968) target = $region52
      $region51: #{tpu_custom_call.1} parent=5 // pred_region
        %s971 = ssub.s32 %s21, 2
        // Predicated region
        $region53: #{tpu_custom_call.1} parent=51 // pred_check
          %p972 = pneg %p118
        $region54: #{tpu_custom_call.1} parent=51 // pred_check_branch
          %974 = sbr.rel (%p972) target = $region56
        $region55: #{tpu_custom_call.1} parent=51 // pred_region
          %s975 = sand.u32 %s103, 1
          %s976 = scalar_lea.sflag [#allocation4], %s975
          %s977 = sand.u32 %s103, 1
          %s978 = smul.addr %s977, 64
          %s979 = scalar_lea.vmem [#allocation5], %s978
          %980 = dma.done %s976, 1024
        $region56: #{tpu_custom_call.1} parent=51 // pred_fallthru
          _
        // Predicated region
        $region57: #{tpu_custom_call.1} parent=51 // pred_check
          %p981 = pneg %p144
        $region58: #{tpu_custom_call.1} parent=51 // pred_check_branch
          %983 = sbr.rel (%p981) target = $region60
        $region59: #{tpu_custom_call.1} parent=51 // pred_region
          %s984 = sand.u32 %s27, 1
          %s985 = scalar_lea.sflag [#allocation7], %s984
          %s986 = sand.u32 %s129, 1
          %s987 = scalar_lea.vmem [#allocation6], %s986
          %988 = dma.done %s985, 16
        $region60: #{tpu_custom_call.1} parent=51 // pred_fallthru
          _
        // Predicated region
        $region61: #{tpu_custom_call.1} parent=51 // pred_check
          %p989 = pneg %p170
        $region62: #{tpu_custom_call.1} parent=51 // pred_check_branch
          %991 = sbr.rel (%p989) target = $region64
        $region63: #{tpu_custom_call.1} parent=51 // pred_region
          %s992 = sand.u32 %s27, 1
          %s993 = scalar_lea.sflag [#allocation7], %s992
          %s994 = sand.u32 %s155, 1
          %s995 = scalar_lea.vmem [#allocation8], %s994
          %996 = dma.done %s993, 16
        $region64: #{tpu_custom_call.1} parent=51 // pred_fallthru
          _
      $region52: #{tpu_custom_call.1} parent=5 // pred_fallthru
        _
    $region6: #{tpu_custom_call.1} parent=1 // loop_footer
      %s25 = sadd.s32 1, %s21
    $region7: #{tpu_custom_call.1} parent=1 // loop_footer_branch
      %20 = sbr.rel target = $region3
    $region8: #{tpu_custom_call.1} parent=1 // loop_exit
      _
    %997 = vsyncpa [#allocation3], 1
    %s998 = scalar_lea.sflag [#allocation3], 1
    %999 = vsyncpa %s998, 1
    %1000 = vsyncpa [#allocation4], 1
    %s1001 = scalar_lea.sflag [#allocation4], 1
    %1002 = vsyncpa %s1001, 1
    %1003 = vsyncpa [#allocation7], 1
    %s1004 = scalar_lea.sflag [#allocation7], 1
    %1005 = vsyncpa %s1004, 1

// kernel: tpu_custom_call.1
$region0: #{tpu_custom_call.1}
  #allocation0 [shape = 'u32[]', space=smem, size = 0x4, offset = 0x4, fixed_abs, tag = 'smem constant byte address 0x4 - core index']
  #allocation1 [shape = 'u32[144,128]{1,0:T(1,128)}', space=vmem, size = 0x12000, scoped, tag = 'internal scratch']
  %s0 = inlined_call_operand.hbm [shape: f32[64,512], index: 0, kind: input, shape index: {}]
  %s1 = inlined_call_operand.vmem [shape: f32[64,128], index: 1, kind: input, shape index: {}]
  %s2 = inlined_call_operand.vmem [shape: f32[128,1], index: 2, kind: input, shape index: {}]
  %s3 = inlined_call_operand.hbm [shape: f32[64,512], index: 3, kind: output, shape index: {0}]
  %s4 = inlined_call_operand.hbm [shape: s32[1,512], index: 4, kind: output, shape index: {1}]
  %s5 = inlined_call_operand.hbm [shape: f32[1,512], index: 5, kind: output, shape index: {2}]
  %6 = xla_tuple %s3, %s4, %s5
  %s7 = sld [smem:[#allocation0]]
  $region65: #{tpu_custom_call.1} parent=0
    _
  %s9 = ssub.s32 1, %s7
  %s10 = scalar_select 0, %s9, %s7
  $region1: #{tpu_custom_call.1} parent=0
    #allocation2 [shape = 'u8[65536]{0}', space=vmem, size = 0x10000, scoped, tag = 'input window, operand 0']
    #allocation3 [shape = 's32[2]{0}', space=sflag, size = 0x8, scoped, tag = 'scoped memory for tpu_custom_call.1']
    #allocation4 [shape = 's32[2]{0}', space=sflag, size = 0x8, scoped, tag = 'scoped memory for tpu_custom_call.1']
    #allocation5 [shape = 'u8[65536]{0}', space=vmem, size = 0x10000, scoped, tag = 'output window, operand 0']
    #allocation6 [shape = 'u8[1024]{0}', space=vmem, size = 0x400, scoped, tag = 'output window, operand 1']
    #allocation7 [shape = 's32[2]{0}', space=sflag, size = 0x8, scoped, tag = 'scoped memory for tpu_custom_call.1']
    #allocation8 [shape = 'u8[1024]{0}', space=vmem, size = 0x400, scoped, tag = 'output window, operand 2']
    %11 = vsyncpa [#allocation3], 0
    %s12 = scalar_lea.sflag [#allocation3], 1
    %13 = vsyncpa %s12, 0
    %14 = vsyncpa [#allocation4], 0
    %s15 = scalar_lea.sflag [#allocation4], 1
    %16 = vsyncpa %s15, 0
    %17 = vsyncpa [#allocation7], 0
    %s18 = scalar_lea.sflag [#allocation7], 1
    %19 = vsyncpa %s18, 0
    loop: start=0, step=1, limit=6
    $region2: #{tpu_custom_call.1} parent=1 // loop_pre_header
      _
    $region3: #{tpu_custom_call.1} parent=1 // loop_header
      %s21 = sphi 0, %s25
      %p22 = scmp.ge.s32.totalorder %s21, 6
      %s31 = sphi 0, %s33
      %s34 = sphi 0, %s31
      %s35 = sphi 0, %s34
      %s51 = sphi 0, %s35
      %s55 = sphi 0, %s55
      %s57 = sphi 0, %s55
      %s58 = sphi 0, %s57
      %s72 = sphi 0, %s58
      %s76 = sphi 0, %s76
      %s78 = sphi 0, %s76
      %s79 = sphi 0, %s78
      %s93 = sphi 0, %s79
      %s99 = sphi 0, %s101
      %s102 = sphi 0, %s99
      %s103 = sphi 0, %s102
      %s119 = sphi 0, %s103
      %s125 = sphi 0, %s127
      %s128 = sphi 0, %s125
      %s129 = sphi 0, %s128
      %s145 = sphi 0, %s129
      %s151 = sphi 0, %s153
      %s154 = sphi 0, %s151
      %s155 = sphi 0, %s154
      %s171 = sphi 0, %s155
    $region4: #{tpu_custom_call.1} parent=1 // loop_header_branch
      %24 = sbr.rel (%p22) target = $region8
    $region5: #{tpu_custom_call.1} parent=1 // loop_body
      %s26 = ssub.s32 %s21, 1
      %s27 = ssub.s32 %s21, 2
      %s28 = sadd.s32 %s21, 1
      %s29 = ssub.s32 %s21, %s28
      %p30 = scmp.eq.s32.totalorder %s29, 0
      %s32 = sadd.s32 %s31, 1
      %s33 = scalar_select %p30, %s31, %s32
      %p36 = pneg %p30
      %p37 = scmp.eq.s32.totalorder %s21, 3
      %p38 = por %p36, %p37
      %p39 = scmp.ne.s32.totalorder %s31, %s34
      %p40 = scmp.eq.s32.totalorder %s21, 0
      %p41 = por %p39, %p40
      %p42 = scmp.ne.s32.totalorder %s31, %s34
      %p43 = scmp.eq.s32.totalorder %s26, 3
      %p44 = por %p42, %p43
      %p45 = scmp.ne.s32.totalorder %s34, %s35
      %p46 = scmp.eq.s32.totalorder %s26, 0
      %p47 = por %p45, %p46
      %p48 = scmp.ne.s32.totalorder %s34, %s35
      %p49 = scmp.eq.s32.totalorder %s27, 3
      %p50 = por %p48, %p49
      %p52 = scmp.ne.s32.totalorder %s35, %s51
      %p53 = scmp.eq.s32.totalorder %s27, 0
      %p54 = por %p52, %p53
      %s56 = sadd.s32 %s55, 1
      %p59 = scmp.eq.s32.totalorder %s21, 3
      %p60 = scmp.ne.s32.totalorder %s55, %s57
      %p61 = scmp.eq.s32.totalorder %s21, 0
      %p62 = por %p60, %p61
      %p63 = scmp.ne.s32.totalorder %s55, %s57
      %p64 = scmp.eq.s32.totalorder %s26, 3
      %p65 = por %p63, %p64
      %p66 = scmp.ne.s32.totalorder %s57, %s58
      %p67 = scmp.eq.s32.totalorder %s26, 0
      %p68 = por %p66, %p67
      %p69 = scmp.ne.s32.totalorder %s57, %s58
      %p70 = scmp.eq.s32.totalorder %s27, 3
      %p71 = por %p69, %p70
      %p73 = scmp.ne.s32.totalorder %s58, %s72
      %p74 = scmp.eq.s32.totalorder %s27, 0
      %p75 = por %p73, %p74
      %s77 = sadd.s32 %s76, 1
      %p80 = scmp.eq.s32.totalorder %s21, 3
      %p81 = scmp.ne.s32.totalorder %s76, %s78
      %p82 = scmp.eq.s32.totalorder %s21, 0
      %p83 = por %p81, %p82
      %p84 = scmp.ne.s32.totalorder %s76, %s78
      %p85 = scmp.eq.s32.totalorder %s26, 3
      %p86 = por %p84, %p85
      %p87 = scmp.ne.s32.totalorder %s78, %s79
      %p88 = scmp.eq.s32.totalorder %s26, 0
      %p89 = por %p87, %p88
      %p90 = scmp.ne.s32.totalorder %s78, %s79
      %p91 = scmp.eq.s32.totalorder %s27, 3
      %p92 = por %p90, %p91
      %p94 = scmp.ne.s32.totalorder %s79, %s93
      %p95 = scmp.eq.s32.totalorder %s27, 0
      %p96 = por %p94, %p95
      %s97 = ssub.s32 %s21, %s28
      %p98 = scmp.eq.s32.totalorder %s97, 0
      %s100 = sadd.s32 %s99, 1
      %s101 = scalar_select %p98, %s99, %s100
      %p104 = pneg %p98
      %p105 = scmp.eq.s32.totalorder %s21, 3
      %p106 = por %p104, %p105
      %p107 = scmp.ne.s32.totalorder %s99, %s102
      %p108 = scmp.eq.s32.totalorder %s21, 0
      %p109 = por %p107, %p108
      %p110 = scmp.ne.s32.totalorder %s99, %s102
      %p111 = scmp.eq.s32.totalorder %s26, 3
      %p112 = por %p110, %p111
      %p113 = scmp.ne.s32.totalorder %s102, %s103
      %p114 = scmp.eq.s32.totalorder %s26, 0
      %p115 = por %p113, %p114
      %p116 = scmp.ne.s32.totalorder %s102, %s103
      %p117 = scmp.eq.s32.totalorder %s27, 3
      %p118 = por %p116, %p117
      %p120 = scmp.ne.s32.totalorder %s103, %s119
      %p121 = scmp.eq.s32.totalorder %s27, 0
      %p122 = por %p120, %p121
      %s123 = ssub.s32 %s21, %s28
      %p124 = scmp.eq.s32.totalorder %s123, 0
      %s126 = sadd.s32 %s125, 1
      %s127 = scalar_select %p124, %s125, %s126
      %p130 = pneg %p124
      %p131 = scmp.eq.s32.totalorder %s21, 3
      %p132 = por %p130, %p131
      %p133 = scmp.ne.s32.totalorder %s125, %s128
      %p134 = scmp.eq.s32.totalorder %s21, 0
      %p135 = por %p133, %p134
      %p136 = scmp.ne.s32.totalorder %s125, %s128
      %p137 = scmp.eq.s32.totalorder %s26, 3
      %p138 = por %p136, %p137
      %p139 = scmp.ne.s32.totalorder %s128, %s129
      %p140 = scmp.eq.s32.totalorder %s26, 0
      %p141 = por %p139, %p140
      %p142 = scmp.ne.s32.totalorder %s128, %s129
      %p143 = scmp.eq.s32.totalorder %s27, 3
      %p144 = por %p142, %p143
      %p146 = scmp.ne.s32.totalorder %s129, %s145
      %p147 = scmp.eq.s32.totalorder %s27, 0
      %p148 = por %p146, %p147
      %s149 = ssub.s32 %s21, %s28
      %p150 = scmp.eq.s32.totalorder %s149, 0
      %s152 = sadd.s32 %s151, 1
      %s153 = scalar_select %p150, %s151, %s152
      %p156 = pneg %p150
      %p157 = scmp.eq.s32.totalorder %s21, 3
      %p158 = por %p156, %p157
      %p159 = scmp.ne.s32.totalorder %s151, %s154
      %p160 = scmp.eq.s32.totalorder %s21, 0
      %p161 = por %p159, %p160
      %p162 = scmp.ne.s32.totalorder %s151, %s154
      %p163 = scmp.eq.s32.totalorder %s26, 3
      %p164 = por %p162, %p163
      %p165 = scmp.ne.s32.totalorder %s154, %s155
      %p166 = scmp.eq.s32.totalorder %s26, 0
      %p167 = por %p165, %p166
      %p168 = scmp.ne.s32.totalorder %s154, %s155
      %p169 = scmp.eq.s32.totalorder %s27, 3
      %p170 = por %p168, %p169
      %p172 = scmp.ne.s32.totalorder %s155, %s171
      %p173 = scmp.eq.s32.totalorder %s27, 0
      %p174 = por %p172, %p173
      %p175 = scmp.le.s32.totalorder 1, %s21
      %p176 = scmp.lt.s32.totalorder %s21, 5
      %p177 = pnand %p175, %p176
      %p178 = pneg %p177
      // Predicated region
      $region9: #{tpu_custom_call.1} parent=5 // pred_check
        _
      $region10: #{tpu_custom_call.1} parent=5 // pred_check_branch
        %180 = sbr.rel (%p177) target = $region12
      $region11: #{tpu_custom_call.1} parent=5 // pred_region
        %s181 = ssub.s32 %s21, 1
        // Predicated region
        $region13: #{tpu_custom_call.1} parent=11 // pred_check
          %p182 = pneg %p68
        $region14: #{tpu_custom_call.1} parent=11 // pred_check_branch
          %184 = sbr.rel (%p182) target = $region16
        $region15: #{tpu_custom_call.1} parent=11 // pred_region
          _
        $region16: #{tpu_custom_call.1} parent=11 // pred_fallthru
          _
        // Predicated region
        $region17: #{tpu_custom_call.1} parent=11 // pred_check
          %p185 = pneg %p89
        $region18: #{tpu_custom_call.1} parent=11 // pred_check_branch
          %187 = sbr.rel (%p185) target = $region20
        $region19: #{tpu_custom_call.1} parent=11 // pred_region
          _
        $region20: #{tpu_custom_call.1} parent=11 // pred_fallthru
          _
      $region12: #{tpu_custom_call.1} parent=5 // pred_fallthru
        _
      %p188 = scmp.lt.s32.totalorder %s21, 4
      // Predicated region
      $region21: #{tpu_custom_call.1} parent=5 // pred_check
        %p189 = pneg %p188
      $region22: #{tpu_custom_call.1} parent=5 // pred_check_branch
        %191 = sbr.rel (%p189) target = $region24
      $region23: #{tpu_custom_call.1} parent=5 // pred_region
        // Predicated region
        $region25: #{tpu_custom_call.1} parent=23 // pred_check
          %p192 = pneg %p41
        $region26: #{tpu_custom_call.1} parent=23 // pred_check_branch
          %194 = sbr.rel (%p192) target = $region28
        $region27: #{tpu_custom_call.1} parent=23 // pred_region
          %s195 = sand.u32 %s31, 1
          %s196 = scalar_lea.sflag [#allocation3], %s195
          %s197 = sand.u32 %s31, 1
          %s198 = smul.addr %s197, 64
          %s199 = scalar_lea.vmem [#allocation2], %s198
          %s201 = ssub.s32 1024, 1024
          %202 = vsyncadd %s196, %s201
          %s203 = smul.addr %s21, 128
          %s204 = scalar_lea.hbm %s0, %s203
          %s205 = sshll.u32 %s199, 4
          %s206 = int_to_ptr.vmem [resolvable:$true] %s205
          %211 = dma.hbm_to_vmem [thread:$0]  %s204, 1024, %s206, %s196, 512, 128, 8
        $region28: #{tpu_custom_call.1} parent=23 // pred_fallthru
          _
      $region24: #{tpu_custom_call.1} parent=5 // pred_fallthru
        _
      %p212 = scmp.le.s32.totalorder 1, %s21
      %p213 = scmp.lt.s32.totalorder %s21, 5
      %p214 = pnand %p212, %p213
      %p215 = pneg %p214
      // Predicated region
      $region29: #{tpu_custom_call.1} parent=5 // pred_check
        _
      $region30: #{tpu_custom_call.1} parent=5 // pred_check_branch
        %217 = sbr.rel (%p214) target = $region32
      $region31: #{tpu_custom_call.1} parent=5 // pred_region
        %s218 = ssub.s32 %s21, 1
        %s219 = sand.u32 %s34, 1
        %s220 = scalar_lea.sflag [#allocation3], %s219
        %s221 = sand.u32 %s34, 1
        %s222 = smul.addr %s221, 64
        %s223 = scalar_lea.vmem [#allocation2], %s222
        // Predicated region
        $region33: #{tpu_custom_call.1} parent=31 // pred_check
          %p224 = pneg %p47
        $region34: #{tpu_custom_call.1} parent=31 // pred_check_branch
          %226 = sbr.rel (%p224) target = $region36
        $region35: #{tpu_custom_call.1} parent=31 // pred_region
          %227 = dma.done %s220, 1024
        $region36: #{tpu_custom_call.1} parent=31 // pred_fallthru
          _
        %s228 = sand.u32 %s34, 1
        %s229 = scalar_lea.sflag [#allocation3], %s228
        %s230 = sand.u32 %s34, 1
        %s231 = smul.addr %s230, 64
        %s232 = scalar_lea.vmem [#allocation2], %s231
        %p233 = pneg %p47
        %p234 = pneg %p44
        %p235 = pneg %p68
        %p236 = pneg %p65
        %p237 = pneg %p89
        %p238 = pneg %p86
        %p239 = pneg %p115
        %p240 = pneg %p112
        %s241 = sand.u32 %s102, 1
        %s242 = scalar_lea.sflag [#allocation4], %s241
        %s243 = sand.u32 %s102, 1
        %s244 = smul.addr %s243, 64
        %s245 = scalar_lea.vmem [#allocation5], %s244
        %p246 = pneg %p141
        %p247 = pneg %p138
        %s248 = sand.u32 %s26, 1
        %s249 = scalar_lea.sflag [#allocation7], %s248
        %s250 = sand.u32 %s128, 1
        %s251 = scalar_lea.vmem [#allocation6], %s250
        %p252 = pneg %p167
        %p253 = pneg %p164
        %s254 = sand.u32 %s26, 1
        %s255 = scalar_lea.sflag [#allocation7], %s254
        %s256 = sand.u32 %s154, 1
        %s257 = scalar_lea.vmem [#allocation8], %s256
        %v258 = vld [vmem:[%s223] sm:$0xff]
        %v259 = vld [vmem:[%s223 + $0x8] sm:$0xff]
        %v260 = vld [vmem:[%s223 + $0x10] sm:$0xff]
        %v261 = vld [vmem:[%s223 + $0x18] sm:$0xff]
        %v262 = vld [vmem:[%s223 + $0x20] sm:$0xff]
        %v263 = vld [vmem:[%s223 + $0x28] sm:$0xff]
        %v264 = vld [vmem:[%s223 + $0x30] sm:$0xff]
        %v265 = vld [vmem:[%s223 + $0x38] sm:$0xff]
        %v266 = vld [vmem:[%s1] sm:$0xff]
        %v267 = vld [vmem:[%s1 + $0x8] sm:$0xff]
        %v268 = vld [vmem:[%s1 + $0x10] sm:$0xff]
        %v269 = vld [vmem:[%s1 + $0x18] sm:$0xff]
        %v270 = vld [vmem:[%s1 + $0x20] sm:$0xff]
        %v271 = vld [vmem:[%s1 + $0x28] sm:$0xff]
        %v272 = vld [vmem:[%s1 + $0x30] sm:$0xff]
        %v273 = vld [vmem:[%s1 + $0x38] sm:$0xff]
        %274 = vxpose.xlu0.b32.start [1/16] %v266, 128
        %275 = vxpose.xlu0.b32.cont [2/16] %v267, 128
        %276 = vxpose.xlu0.b32.cont [3/16] %v268, 128
        %277 = vxpose.xlu0.b32.cont [4/16] %v269, 128
        %278 = vxpose.xlu0.b32.cont [5/16] %v270, 128
        %279 = vxpose.xlu0.b32.cont [6/16] %v271, 128
        %280 = vxpose.xlu0.b32.cont [7/16] %v272, 128
        %281 = vxpose.xlu0.b32.cont [8/16] %v273, 128
        %282 = vxpose.xlu0.b32.cont [9/16] 0.0, 128
        %283 = vxpose.xlu0.b32.cont [10/16] 0.0, 128
        %284 = vxpose.xlu0.b32.cont [11/16] 0.0, 128
        %285 = vxpose.xlu0.b32.cont [12/16] 0.0, 128
        %286 = vxpose.xlu0.b32.cont [13/16] 0.0, 128
        %287 = vxpose.xlu0.b32.cont [14/16] 0.0, 128
        %288 = vxpose.xlu0.b32.cont [15/16] 0.0, 128
        %289 = vxpose.xlu0.b32.end [16/16] 0.0, 128
        %v290 = vpop.trf.xlu0
        %v291 = vpop.trf.xlu0
        %v292 = vpop.trf.xlu0
        %v293 = vpop.trf.xlu0
        %v294 = vpop.trf.xlu0
        %v295 = vpop.trf.xlu0
        %v296 = vpop.trf.xlu0
        %v297 = vpop.trf.xlu0
        %v298 = vpop.trf.xlu0
        %v299 = vpop.trf.xlu0
        %v300 = vpop.trf.xlu0
        %v301 = vpop.trf.xlu0
        %v302 = vpop.trf.xlu0
        %v303 = vpop.trf.xlu0
        %v304 = vpop.trf.xlu0
        %v305 = vpop.trf.xlu0
        %vm306 = vcmask 523264
        %v308 = vsel %vm306, %v290, 0
        %v311 = vsel %vm306, %v291, 0
        %v314 = vsel %vm306, %v292, 0
        %v317 = vsel %vm306, %v293, 0
        %v320 = vsel %vm306, %v294, 0
        %v323 = vsel %vm306, %v295, 0
        %v326 = vsel %vm306, %v296, 0
        %v329 = vsel %vm306, %v297, 0
        %v332 = vsel %vm306, %v298, 0
        %v335 = vsel %vm306, %v299, 0
        %v338 = vsel %vm306, %v300, 0
        %v341 = vsel %vm306, %v301, 0
        %v344 = vsel %vm306, %v302, 0
        %v347 = vsel %vm306, %v303, 0
        %v350 = vsel %vm306, %v304, 0
        %v353 = vsel %vm306, %v305, 0
        %355 = vmatprep.subr.mxu0 0.0
        %356 = vmatpush1.msra.mxu0 0.0
        %357 = vmatprep.subr.mxu0 0.0
        %358 = vmatpush1.msra.mxu0 0.0
        %359 = vmatprep.subr.mxu0 0.0
        %360 = vmatpush1.msra.mxu0 0.0
        %361 = vmatprep.subr.mxu0 0.0
        %362 = vmatpush1.msra.mxu0 0.0
        %363 = vmatprep.subr.mxu0 0.0
        %364 = vmatpush1.msra.mxu0 0.0
        %365 = vmatprep.subr.mxu0 0.0
        %366 = vmatpush1.msra.mxu0 0.0
        %367 = vmatprep.subr.mxu0 0.0
        %368 = vmatpush1.msra.mxu0 0.0
        %369 = vmatprep.subr.mxu0 0.0
        %370 = vmatpush1.msra.mxu0 0.0
        %371 = vmatprep.subr.mxu0 0.0
        %372 = vmatpush1.msra.mxu0 %v265
        %373 = vmatprep.subr.mxu0 0.0
        %374 = vmatpush1.msra.mxu0 %v264
        %375 = vmatprep.subr.mxu0 0.0
        %376 = vmatpush1.msra.mxu0 %v263
        %377 = vmatprep.subr.mxu0 0.0
        %378 = vmatpush1.msra.mxu0 %v262
        %379 = vmatprep.subr.mxu0 0.0
        %380 = vmatpush1.msra.mxu0 %v261
        %381 = vmatprep.subr.mxu0 0.0
        %382 = vmatpush1.msra.mxu0 %v260
        %383 = vmatprep.subr.mxu0 0.0
        %384 = vmatpush1.msra.mxu0 %v259
        %385 = vmatprep.subr.mxu0 0.0
        %386 = vmatpush1.msra.mxu0 %v258
        %387 = vmatprep.subr.mxu0 0.0
        %388 = vmatpush2.msra.mxu0 0.0
        %389 = vmatprep.subr.mxu0 0.0
        %390 = vmatpush2.msra.mxu0 0.0
        %391 = vmatprep.subr.mxu0 0.0
        %392 = vmatpush2.msra.mxu0 0.0
        %393 = vmatprep.subr.mxu0 0.0
        %394 = vmatpush2.msra.mxu0 0.0
        %395 = vmatprep.subr.mxu0 0.0
        %396 = vmatpush2.msra.mxu0 0.0
        %397 = vmatprep.subr.mxu0 0.0
        %398 = vmatpush2.msra.mxu0 0.0
        %399 = vmatprep.subr.mxu0 0.0
        %400 = vmatpush2.msra.mxu0 0.0
        %401 = vmatprep.subr.mxu0 0.0
        %402 = vmatpush2.msra.mxu0 0.0
        %403 = vmatprep.subr.mxu0 0.0
        %404 = vmatpush2.msra.mxu0 0.0
        %405 = vmatprep.subr.mxu0 0.0
        %406 = vmatpush2.msra.mxu0 0.0
        %407 = vmatprep.subr.mxu0 0.0
        %408 = vmatpush2.msra.mxu0 0.0
        %409 = vmatprep.subr.mxu0 0.0
        %410 = vmatpush2.msra.mxu0 0.0
        %411 = vmatprep.subr.mxu0 0.0
        %412 = vmatpush2.msra.mxu0 0.0
        %413 = vmatprep.subr.mxu0 0.0
        %414 = vmatpush2.msra.mxu0 0.0
        %415 = vmatprep.subr.mxu0 0.0
        %416 = vmatpush2.msra.mxu0 0.0
        %417 = vmatprep.subr.mxu0 0.0
        %418 = vmatpush2.msra.mxu0 0.0
        %419 = vmatprep.mubr.f32.mxu0 0.0
        %420 = vmatmul.mubr.f32.gmra.mxu0 %v308
        %v421 = vpop.f32.mrf.mxu0
        %v422 = vadd.f32 0.0, %v421
        %v423 = vpop.f32.mrf.mxu0
        %424 = vmatprep.mubr.f32.mxu0 0.0
        %425 = vmatmul.mubr.f32.gmra.mxu0 %v311
        %v426 = vpop.f32.mrf.mxu0
        %v427 = vadd.f32 0.0, %v426
        %v428 = vpop.f32.mrf.mxu0
        %429 = vmatprep.mubr.f32.mxu0 0.0
        %430 = vmatmul.mubr.f32.gmra.mxu0 %v314
        %v431 = vpop.f32.mrf.mxu0
        %v432 = vadd.f32 0.0, %v431
        %v433 = vpop.f32.mrf.mxu0
        %434 = vmatprep.mubr.f32.mxu0 0.0
        %435 = vmatmul.mubr.f32.gmra.mxu0 %v317
        %v436 = vpop.f32.mrf.mxu0
        %v437 = vadd.f32 0.0, %v436
        %v438 = vpop.f32.mrf.mxu0
        %439 = vmatprep.mubr.f32.mxu0 0.0
        %440 = vmatmul.mubr.f32.gmra.mxu0 %v320
        %v441 = vpop.f32.mrf.mxu0
        %v442 = vadd.f32 0.0, %v441
        %v443 = vpop.f32.mrf.mxu0
        %444 = vmatprep.mubr.f32.mxu0 0.0
        %445 = vmatmul.mubr.f32.gmra.mxu0 %v323
        %v446 = vpop.f32.mrf.mxu0
        %v447 = vadd.f32 0.0, %v446
        %v448 = vpop.f32.mrf.mxu0
        %449 = vmatprep.mubr.f32.mxu0 0.0
        %450 = vmatmul.mubr.f32.gmra.mxu0 %v326
        %v451 = vpop.f32.mrf.mxu0
        %v452 = vadd.f32 0.0, %v451
        %v453 = vpop.f32.mrf.mxu0
        %454 = vmatprep.mubr.f32.mxu0 0.0
        %455 = vmatmul.mubr.f32.gmra.mxu0 %v329
        %v456 = vpop.f32.mrf.mxu0
        %v457 = vadd.f32 0.0, %v456
        %v458 = vpop.f32.mrf.mxu0
        %459 = vmatprep.mubr.f32.mxu0 0.0
        %460 = vmatmul.mubr.f32.gmra.mxu0 %v332
        %v461 = vpop.f32.mrf.mxu0
        %v462 = vadd.f32 0.0, %v461
        %v463 = vpop.f32.mrf.mxu0
        %464 = vmatprep.mubr.f32.mxu0 0.0
        %465 = vmatmul.mubr.f32.gmra.mxu0 %v335
        %v466 = vpop.f32.mrf.mxu0
        %v467 = vadd.f32 0.0, %v466
        %v468 = vpop.f32.mrf.mxu0
        %469 = vmatprep.mubr.f32.mxu0 0.0
        %470 = vmatmul.mubr.f32.gmra.mxu0 %v338
        %v471 = vpop.f32.mrf.mxu0
        %v472 = vadd.f32 0.0, %v471
        %v473 = vpop.f32.mrf.mxu0
        %474 = vmatprep.mubr.f32.mxu0 0.0
        %475 = vmatmul.mubr.f32.gmra.mxu0 %v341
        %v476 = vpop.f32.mrf.mxu0
        %v477 = vadd.f32 0.0, %v476
        %v478 = vpop.f32.mrf.mxu0
        %479 = vmatprep.mubr.f32.mxu0 0.0
        %480 = vmatmul.mubr.f32.gmra.mxu0 %v344
        %v481 = vpop.f32.mrf.mxu0
        %v482 = vadd.f32 0.0, %v481
        %v483 = vpop.f32.mrf.mxu0
        %484 = vmatprep.mubr.f32.mxu0 0.0
        %485 = vmatmul.mubr.f32.gmra.mxu0 %v347
        %v486 = vpop.f32.mrf.mxu0
        %v487 = vadd.f32 0.0, %v486
        %v488 = vpop.f32.mrf.mxu0
        %489 = vmatprep.mubr.f32.mxu0 0.0
        %490 = vmatmul.mubr.f32.gmra.mxu0 %v350
        %v491 = vpop.f32.mrf.mxu0
        %v492 = vadd.f32 0.0, %v491
        %v493 = vpop.f32.mrf.mxu0
        %494 = vmatprep.mubr.f32.mxu0 0.0
        %495 = vmatmul.mubr.f32.gmra.mxu0 %v353
        %v496 = vpop.f32.mrf.mxu0
        %v497 = vadd.f32 0.0, %v496
        %v498 = vpop.f32.mrf.mxu0
        %499 = vdwg.mxu0
        %v500 = vld [vmem:[%s2] sm:$0xff]
        %v501 = vld [vmem:[%s2 + $0x8] sm:$0xff]
        %v502 = vld [vmem:[%s2 + $0x10] sm:$0xff]
        %v503 = vld [vmem:[%s2 + $0x18] sm:$0xff]
        %v504 = vld [vmem:[%s2 + $0x20] sm:$0xff]
        %v505 = vld [vmem:[%s2 + $0x28] sm:$0xff]
        %v506 = vld [vmem:[%s2 + $0x30] sm:$0xff]
        %v507 = vld [vmem:[%s2 + $0x38] sm:$0xff]
        %v508 = vld [vmem:[%s2 + $0x40] sm:$0xff]
        %v509 = vld [vmem:[%s2 + $0x48] sm:$0xff]
        %v510 = vld [vmem:[%s2 + $0x50] sm:$0xff]
        %v511 = vld [vmem:[%s2 + $0x58] sm:$0xff]
        %v512 = vld [vmem:[%s2 + $0x60] sm:$0xff]
        %v513 = vld [vmem:[%s2 + $0x68] sm:$0xff]
        %v514 = vld [vmem:[%s2 + $0x70] sm:$0xff]
        %v515 = vld [vmem:[%s2 + $0x78] sm:$0xff]
        %517 = vset.pattern.permute.xlu0 0
        %518 = vperm.xlu0 %517, %v500
        %v519 = vpop.permute.xlu0 %518
        %522 = vset.pattern.permute.xlu0 0
        %523 = vperm.xlu0 %522, %v501
        %v524 = vpop.permute.xlu0 %523
        %527 = vset.pattern.permute.xlu0 0
        %528 = vperm.xlu0 %527, %v502
        %v529 = vpop.permute.xlu0 %528
        %532 = vset.pattern.permute.xlu0 0
        %533 = vperm.xlu0 %532, %v503
        %v534 = vpop.permute.xlu0 %533
        %537 = vset.pattern.permute.xlu0 0
        %538 = vperm.xlu0 %537, %v504
        %v539 = vpop.permute.xlu0 %538
        %542 = vset.pattern.permute.xlu0 0
        %543 = vperm.xlu0 %542, %v505
        %v544 = vpop.permute.xlu0 %543
        %547 = vset.pattern.permute.xlu0 0
        %548 = vperm.xlu0 %547, %v506
        %v549 = vpop.permute.xlu0 %548
        %552 = vset.pattern.permute.xlu0 0
        %553 = vperm.xlu0 %552, %v507
        %v554 = vpop.permute.xlu0 %553
        %557 = vset.pattern.permute.xlu0 0
        %558 = vperm.xlu0 %557, %v508
        %v559 = vpop.permute.xlu0 %558
        %562 = vset.pattern.permute.xlu0 0
        %563 = vperm.xlu0 %562, %v509
        %v564 = vpop.permute.xlu0 %563
        %567 = vset.pattern.permute.xlu0 0
        %568 = vperm.xlu0 %567, %v510
        %v569 = vpop.permute.xlu0 %568
        %572 = vset.pattern.permute.xlu0 0
        %573 = vperm.xlu0 %572, %v511
        %v574 = vpop.permute.xlu0 %573
        %577 = vset.pattern.permute.xlu0 0
        %578 = vperm.xlu0 %577, %v512
        %v579 = vpop.permute.xlu0 %578
        %582 = vset.pattern.permute.xlu0 0
        %583 = vperm.xlu0 %582, %v513
        %v584 = vpop.permute.xlu0 %583
        %587 = vset.pattern.permute.xlu0 0
        %588 = vperm.xlu0 %587, %v514
        %v589 = vpop.permute.xlu0 %588
        %592 = vset.pattern.permute.xlu0 0
        %593 = vperm.xlu0 %592, %v515
        %v594 = vpop.permute.xlu0 %593
        %v596 = vsub.f32 %v519, %v422
        %v597 = vsub.f32 %v524, %v427
        %v598 = vsub.f32 %v529, %v432
        %v599 = vsub.f32 %v534, %v437
        %v600 = vsub.f32 %v539, %v442
        %v601 = vsub.f32 %v544, %v447
        %v602 = vsub.f32 %v549, %v452
        %v603 = vsub.f32 %v554, %v457
        %v604 = vsub.f32 %v559, %v462
        %v605 = vsub.f32 %v564, %v467
        %v606 = vsub.f32 %v569, %v472
        %v607 = vsub.f32 %v574, %v477
        %v608 = vsub.f32 %v579, %v482
        %v609 = vsub.f32 %v584, %v487
        %v610 = vsub.f32 %v589, %v492
        %v611 = vsub.f32 %v594, %v497
        %v612 = vmin.f32 %v596, %v600
        %v613 = vmin.f32 %v597, %v601
        %v614 = vmin.f32 %v598, %v602
        %v615 = vmin.f32 %v599, %v603
        %v616 = vmin.f32 %v612, %v604
        %v617 = vmin.f32 %v613, %v605
        %v618 = vmin.f32 %v614, %v606
        %v619 = vmin.f32 %v615, %v607
        %v620 = vmin.f32 %v616, %v608
        %v621 = vmin.f32 %v617, %v609
        %v622 = vmin.f32 %v618, %v610
        %v623 = vmin.f32 %v619, %v611
        %v624 = vmin.f32 %v620, %v621
        %v625 = vmin.f32 %v622, %v623
        %v626 = vmin.f32 %v624, %v625
        %v627 = vrot.slane %v626, 4
        %v628 = vmin.f32 %v626, %v627
        %v629 = vrot.slane %v628, 2
        %v630 = vmin.f32 %v628, %v629
        %v631 = vrot.slane %v630, 1
        %v632 = vmin.f32 %v630, %v631
        %v633 = vlaneseq
        %v634 = vshrl.u32 %v633, 7
        %v635 = vadd.s32 %v634, 8
        %v636 = vadd.s32 %v634, 16
        %v637 = vadd.s32 %v634, 24
        %v638 = vadd.s32 %v634, 32
        %v639 = vadd.s32 %v634, 40
        %v640 = vadd.s32 %v634, 48
        %v641 = vadd.s32 %v634, 56
        %v642 = vadd.s32 %v634, 64
        %v643 = vadd.s32 %v634, 72
        %v644 = vadd.s32 %v634, 80
        %v645 = vadd.s32 %v634, 88
        %v646 = vadd.s32 %v634, 96
        %v647 = vadd.s32 %v634, 104
        %v648 = vadd.s32 %v634, 112
        %v649 = vadd.s32 %v634, 120
        %vm650 = vcmp.eq.f32.partialorder %v596, %v632
        %vm651 = vcmp.eq.f32.partialorder %v597, %v632
        %vm652 = vcmp.eq.f32.partialorder %v598, %v632
        %vm653 = vcmp.eq.f32.partialorder %v599, %v632
        %vm654 = vcmp.eq.f32.partialorder %v600, %v632
        %vm655 = vcmp.eq.f32.partialorder %v601, %v632
        %vm656 = vcmp.eq.f32.partialorder %v602, %v632
        %vm657 = vcmp.eq.f32.partialorder %v603, %v632
        %vm658 = vcmp.eq.f32.partialorder %v604, %v632
        %vm659 = vcmp.eq.f32.partialorder %v605, %v632
        %vm660 = vcmp.eq.f32.partialorder %v606, %v632
        %vm661 = vcmp.eq.f32.partialorder %v607, %v632
        %vm662 = vcmp.eq.f32.partialorder %v608, %v632
        %vm663 = vcmp.eq.f32.partialorder %v609, %v632
        %vm664 = vcmp.eq.f32.partialorder %v610, %v632
        %vm665 = vcmp.eq.f32.partialorder %v611, %v632
        %v666 = vsel %vm650, %v634, 128
        %v667 = vsel %vm651, %v635, 128
        %v668 = vsel %vm652, %v636, 128
        %v669 = vsel %vm653, %v637, 128
        %v670 = vsel %vm654, %v638, 128
        %v671 = vsel %vm655, %v639, 128
        %v672 = vsel %vm656, %v640, 128
        %v673 = vsel %vm657, %v641, 128
        %v674 = vsel %vm658, %v642, 128
        %v675 = vsel %vm659, %v643, 128
        %v676 = vsel %vm660, %v644, 128
        %v677 = vsel %vm661, %v645, 128
        %v678 = vsel %vm662, %v646, 128
        %v679 = vsel %vm663, %v647, 128
        %v680 = vsel %vm664, %v648, 128
        %v681 = vsel %vm665, %v649, 128
        %vm682 = vcmp.lt.s32.totalorder %v666, %v670
        %v683 = vsel %vm682, %v666, %v670
        %vm684 = vcmp.lt.s32.totalorder %v667, %v671
        %v685 = vsel %vm684, %v667, %v671
        %vm686 = vcmp.lt.s32.totalorder %v668, %v672
        %v687 = vsel %vm686, %v668, %v672
        %vm688 = vcmp.lt.s32.totalorder %v669, %v673
        %v689 = vsel %vm688, %v669, %v673
        %vm690 = vcmp.lt.s32.totalorder %v683, %v674
        %v691 = vsel %vm690, %v683, %v674
        %vm692 = vcmp.lt.s32.totalorder %v685, %v675
        %v693 = vsel %vm692, %v685, %v675
        %vm694 = vcmp.lt.s32.totalorder %v687, %v676
        %v695 = vsel %vm694, %v687, %v676
        %vm696 = vcmp.lt.s32.totalorder %v689, %v677
        %v697 = vsel %vm696, %v689, %v677
        %vm698 = vcmp.lt.s32.totalorder %v691, %v678
        %v699 = vsel %vm698, %v691, %v678
        %vm700 = vcmp.lt.s32.totalorder %v693, %v679
        %v701 = vsel %vm700, %v693, %v679
        %vm702 = vcmp.lt.s32.totalorder %v695, %v680
        %v703 = vsel %vm702, %v695, %v680
        %vm704 = vcmp.lt.s32.totalorder %v697, %v681
        %v705 = vsel %vm704, %v697, %v681
        %vm706 = vcmp.lt.s32.totalorder %v699, %v701
        %v707 = vsel %vm706, %v699, %v701
        %vm708 = vcmp.lt.s32.totalorder %v703, %v705
        %v709 = vsel %vm708, %v703, %v705
        %vm710 = vcmp.lt.s32.totalorder %v707, %v709
        %v711 = vsel %vm710, %v707, %v709
        %v712 = vrot.slane %v711, 4
        %vm713 = vcmp.lt.s32.totalorder %v711, %v712
        %v714 = vsel %vm713, %v711, %v712
        %v715 = vrot.slane %v714, 2
        %vm716 = vcmp.lt.s32.totalorder %v714, %v715
        %v717 = vsel %vm716, %v714, %v715
        %v718 = vrot.slane %v717, 1
        %vm719 = vcmp.lt.s32.totalorder %v717, %v718
        %v720 = vsel %vm719, %v717, %v718
        %721 = vst [vmem:[%s251] sm:$0x1] %v720
        %vm722 = vcmp.eq.s32.totalorder %v634, %v720
        %vm723 = vcmp.eq.s32.totalorder %v635, %v720
        %vm724 = vcmp.eq.s32.totalorder %v636, %v720
        %vm725 = vcmp.eq.s32.totalorder %v637, %v720
        %vm726 = vcmp.eq.s32.totalorder %v638, %v720
        %vm727 = vcmp.eq.s32.totalorder %v639, %v720
        %vm728 = vcmp.eq.s32.totalorder %v640, %v720
        %vm729 = vcmp.eq.s32.totalorder %v641, %v720
        %vm730 = vcmp.eq.s32.totalorder %v642, %v720
        %vm731 = vcmp.eq.s32.totalorder %v643, %v720
        %vm732 = vcmp.eq.s32.totalorder %v644, %v720
        %vm733 = vcmp.eq.s32.totalorder %v645, %v720
        %vm734 = vcmp.eq.s32.totalorder %v646, %v720
        %vm735 = vcmp.eq.s32.totalorder %v647, %v720
        %vm736 = vcmp.eq.s32.totalorder %v648, %v720
        %vm737 = vcmp.eq.s32.totalorder %v649, %v720
        %v738 = vsel %vm722, 1, 0
        %v739 = vsel %vm723, 1, 0
        %v740 = vsel %vm724, 1, 0
        %v741 = vsel %vm725, 1, 0
        %v742 = vsel %vm726, 1, 0
        %v743 = vsel %vm727, 1, 0
        %v744 = vsel %vm728, 1, 0
        %v745 = vsel %vm729, 1, 0
        %v746 = vsel %vm730, 1, 0
        %v747 = vsel %vm731, 1, 0
        %v748 = vsel %vm732, 1, 0
        %v749 = vsel %vm733, 1, 0
        %v750 = vsel %vm734, 1, 0
        %v751 = vsel %vm735, 1, 0
        %v752 = vsel %vm736, 1, 0
        %v753 = vsel %vm737, 1, 0
        %v754 = vcvt.s32.f32 %v738
        %v755 = vcvt.s32.f32 %v739
        %v756 = vcvt.s32.f32 %v740
        %v757 = vcvt.s32.f32 %v741
        %v758 = vcvt.s32.f32 %v742
        %v759 = vcvt.s32.f32 %v743
        %v760 = vcvt.s32.f32 %v744
        %v761 = vcvt.s32.f32 %v745
        %v762 = vcvt.s32.f32 %v746
        %v763 = vcvt.s32.f32 %v747
        %v764 = vcvt.s32.f32 %v748
        %v765 = vcvt.s32.f32 %v749
        %v766 = vcvt.s32.f32 %v750
        %v767 = vcvt.s32.f32 %v751
        %v768 = vcvt.s32.f32 %v752
        %v769 = vcvt.s32.f32 %v753
        %770 = vmatprep.subr.mxu0 0.0
        %771 = vmatpush1.msra.mxu0 %v769
        %772 = vmatprep.subr.mxu0 0.0
        %773 = vmatpush1.msra.mxu0 %v768
        %774 = vmatprep.subr.mxu0 0.0
        %775 = vmatpush1.msra.mxu0 %v767
        %776 = vmatprep.subr.mxu0 0.0
        %777 = vmatpush1.msra.mxu0 %v766
        %778 = vmatprep.subr.mxu0 0.0
        %779 = vmatpush1.msra.mxu0 %v765
        %780 = vmatprep.subr.mxu0 0.0
        %781 = vmatpush1.msra.mxu0 %v764
        %782 = vmatprep.subr.mxu0 0.0
        %783 = vmatpush1.msra.mxu0 %v763
        %784 = vmatprep.subr.mxu0 0.0
        %785 = vmatpush1.msra.mxu0 %v762
        %786 = vmatprep.subr.mxu0 0.0
        %787 = vmatpush1.msra.mxu0 %v761
        %788 = vmatprep.subr.mxu0 0.0
        %789 = vmatpush1.msra.mxu0 %v760
        %790 = vmatprep.subr.mxu0 0.0
        %791 = vmatpush1.msra.mxu0 %v759
        %792 = vmatprep.subr.mxu0 0.0
        %793 = vmatpush1.msra.mxu0 %v758
        %794 = vmatprep.subr.mxu0 0.0
        %795 = vmatpush1.msra.mxu0 %v757
        %796 = vmatprep.subr.mxu0 0.0
        %797 = vmatpush1.msra.mxu0 %v756
        %798 = vmatprep.subr.mxu0 0.0
        %799 = vmatpush1.msra.mxu0 %v755
        %800 = vmatprep.subr.mxu0 0.0
        %801 = vmatpush1.msra.mxu0 %v754
        %802 = vmatprep.subr.mxu0 0.0
        %803 = vmatpush2.msra.mxu0 0.0
        %804 = vmatprep.subr.mxu0 0.0
        %805 = vmatpush2.msra.mxu0 0.0
        %806 = vmatprep.subr.mxu0 0.0
        %807 = vmatpush2.msra.mxu0 0.0
        %808 = vmatprep.subr.mxu0 0.0
        %809 = vmatpush2.msra.mxu0 0.0
        %810 = vmatprep.subr.mxu0 0.0
        %811 = vmatpush2.msra.mxu0 0.0
        %812 = vmatprep.subr.mxu0 0.0
        %813 = vmatpush2.msra.mxu0 0.0
        %814 = vmatprep.subr.mxu0 0.0
        %815 = vmatpush2.msra.mxu0 0.0
        %816 = vmatprep.subr.mxu0 0.0
        %817 = vmatpush2.msra.mxu0 0.0
        %818 = vmatprep.subr.mxu0 0.0
        %819 = vmatpush2.msra.mxu0 0.0
        %820 = vmatprep.subr.mxu0 0.0
        %821 = vmatpush2.msra.mxu0 0.0
        %822 = vmatprep.subr.mxu0 0.0
        %823 = vmatpush2.msra.mxu0 0.0
        %824 = vmatprep.subr.mxu0 0.0
        %825 = vmatpush2.msra.mxu0 0.0
        %826 = vmatprep.subr.mxu0 0.0
        %827 = vmatpush2.msra.mxu0 0.0
        %828 = vmatprep.subr.mxu0 0.0
        %829 = vmatpush2.msra.mxu0 0.0
        %830 = vmatprep.subr.mxu0 0.0
        %831 = vmatpush2.msra.mxu0 0.0
        %832 = vmatprep.subr.mxu0 0.0
        %833 = vmatpush2.msra.mxu0 0.0
        %834 = vmatprep.mubr.f32.mxu0 0.0
        %835 = vmatmul.mubr.f32.gmra.mxu0 %v266
        %v836 = vpop.f32.mrf.mxu0
        %v837 = vadd.f32 0.0, %v836
        %v838 = vpop.f32.mrf.mxu0
        %839 = vmatprep.mubr.f32.mxu0 0.0
        %840 = vmatmul.mubr.f32.gmra.mxu0 %v267
        %v841 = vpop.f32.mrf.mxu0
        %v842 = vadd.f32 0.0, %v841
        %v843 = vpop.f32.mrf.mxu0
        %844 = vmatprep.mubr.f32.mxu0 0.0
        %845 = vmatmul.mubr.f32.gmra.mxu0 %v268
        %v846 = vpop.f32.mrf.mxu0
        %v847 = vadd.f32 0.0, %v846
        %v848 = vpop.f32.mrf.mxu0
        %849 = vmatprep.mubr.f32.mxu0 0.0
        %850 = vmatmul.mubr.f32.gmra.mxu0 %v269
        %v851 = vpop.f32.mrf.mxu0
        %v852 = vadd.f32 0.0, %v851
        %v853 = vpop.f32.mrf.mxu0
        %854 = vmatprep.mubr.f32.mxu0 0.0
        %855 = vmatmul.mubr.f32.gmra.mxu0 %v270
        %v856 = vpop.f32.mrf.mxu0
        %v857 = vadd.f32 0.0, %v856
        %v858 = vpop.f32.mrf.mxu0
        %859 = vmatprep.mubr.f32.mxu0 0.0
        %860 = vmatmul.mubr.f32.gmra.mxu0 %v271
        %v861 = vpop.f32.mrf.mxu0
        %v862 = vadd.f32 0.0, %v861
        %v863 = vpop.f32.mrf.mxu0
        %864 = vmatprep.mubr.f32.mxu0 0.0
        %865 = vmatmul.mubr.f32.gmra.mxu0 %v272
        %v866 = vpop.f32.mrf.mxu0
        %v867 = vadd.f32 0.0, %v866
        %v868 = vpop.f32.mrf.mxu0
        %869 = vmatprep.mubr.f32.mxu0 0.0
        %870 = vmatmul.mubr.f32.gmra.mxu0 %v273
        %v871 = vpop.f32.mrf.mxu0
        %v872 = vadd.f32 0.0, %v871
        %v873 = vpop.f32.mrf.mxu0
        %874 = vdwg.mxu0
        %875 = vst [vmem:[%s245] sm:$0xff] %v837
        %876 = vst [vmem:[%s245 + $0x8] sm:$0xff] %v842
        %877 = vst [vmem:[%s245 + $0x10] sm:$0xff] %v847
        %878 = vst [vmem:[%s245 + $0x18] sm:$0xff] %v852
        %879 = vst [vmem:[%s245 + $0x20] sm:$0xff] %v857
        %880 = vst [vmem:[%s245 + $0x28] sm:$0xff] %v862
        %881 = vst [vmem:[%s245 + $0x30] sm:$0xff] %v867
        %882 = vst [vmem:[%s245 + $0x38] sm:$0xff] %v872
        %v883 = vsub.f32 %v258, %v837
        %v884 = vsub.f32 %v259, %v842
        %v885 = vsub.f32 %v260, %v847
        %v886 = vsub.f32 %v261, %v852
        %v887 = vsub.f32 %v262, %v857
        %v888 = vsub.f32 %v263, %v862
        %v889 = vsub.f32 %v264, %v867
        %v890 = vsub.f32 %v265, %v872
        %v891 = vmul.f32 %v883, %v883
        %v892 = vmul.f32 %v884, %v884
        %v893 = vmul.f32 %v885, %v885
        %v894 = vmul.f32 %v886, %v886
        %v895 = vmul.f32 %v887, %v887
        %v896 = vmul.f32 %v888, %v888
        %v897 = vmul.f32 %v889, %v889
        %v898 = vmul.f32 %v890, %v890
        %v899 = vadd.f32 %v891, %v892
        %v900 = vadd.f32 %v899, %v893
        %v901 = vadd.f32 %v900, %v894
        %v902 = vadd.f32 %v901, %v895
        %v903 = vadd.f32 %v902, %v896
        %v904 = vadd.f32 %v903, %v897
        %v905 = vadd.f32 %v904, %v898
        %v906 = vrot.slane %v905, 4
        %v907 = vadd.f32 %v905, %v906
        %v908 = vrot.slane %v907, 2
        %v909 = vadd.f32 %v907, %v908
        %v910 = vrot.slane %v909, 1
        %v911 = vadd.f32 %v909, %v910
        %912 = vst [vmem:[%s257] sm:$0x1] %v911
        %s913 = sand.u32 %s102, 1
        %s914 = scalar_lea.sflag [#allocation4], %s913
        %s915 = sand.u32 %s102, 1
        %s916 = smul.addr %s915, 64
        %s917 = scalar_lea.vmem [#allocation5], %s916
        %s918 = sand.u32 %s26, 1
        %s919 = scalar_lea.sflag [#allocation7], %s918
        %s920 = sand.u32 %s128, 1
        %s921 = scalar_lea.vmem [#allocation6], %s920
        %s922 = sand.u32 %s26, 1
        %s923 = scalar_lea.sflag [#allocation7], %s922
        %s924 = sand.u32 %s154, 1
        %s925 = scalar_lea.vmem [#allocation8], %s924
        // Predicated region
        $region37: #{tpu_custom_call.1} parent=31 // pred_check
          %p926 = pneg %p112
        $region38: #{tpu_custom_call.1} parent=31 // pred_check_branch
          %928 = sbr.rel (%p926) target = $region40
        $region39: #{tpu_custom_call.1} parent=31 // pred_region
          %s930 = ssub.s32 1024, 1024
          %931 = vsyncadd %s914, %s930
          %s932 = smul.addr %s26, 128
          %s933 = scalar_lea.hbm %s3, %s932
          %s934 = sshll.u32 %s917, 4
          %s935 = int_to_ptr.vmem [resolvable:$true] %s934
          %940 = dma.vmem_to_hbm [thread:$0]  %s935, 1024, %s933, %s914, 128, 512, 8
        $region40: #{tpu_custom_call.1} parent=31 // pred_fallthru
          _
        // Predicated region
        $region41: #{tpu_custom_call.1} parent=31 // pred_check
          %p941 = pneg %p138
        $region42: #{tpu_custom_call.1} parent=31 // pred_check_branch
          %943 = sbr.rel (%p941) target = $region44
        $region43: #{tpu_custom_call.1} parent=31 // pred_region
          %s945 = ssub.s32 16, 16
          %946 = vsyncadd %s919, %s945
          %s947 = smul.addr %s26, 16
          %s948 = scalar_lea.hbm %s4, %s947
          %s950 = sshll.u32 %s921, 4
          %s951 = int_to_ptr.vmem [resolvable:$true] %s950
          %953 = dma.vmem_to_hbm [thread:$0]  %s951, 16, %s948, %s919
        $region44: #{tpu_custom_call.1} parent=31 // pred_fallthru
          _
        // Predicated region
        $region45: #{tpu_custom_call.1} parent=31 // pred_check
          %p954 = pneg %p164
        $region46: #{tpu_custom_call.1} parent=31 // pred_check_branch
          %956 = sbr.rel (%p954) target = $region48
        $region47: #{tpu_custom_call.1} parent=31 // pred_region
          %s958 = ssub.s32 16, 16
          %959 = vsyncadd %s923, %s958
          %s960 = smul.addr %s26, 16
          %s961 = scalar_lea.hbm %s5, %s960
          %s963 = sshll.u32 %s925, 4
          %s964 = int_to_ptr.vmem [resolvable:$true] %s963
          %966 = dma.vmem_to_hbm [thread:$0]  %s964, 16, %s961, %s923
        $region48: #{tpu_custom_call.1} parent=31 // pred_fallthru
          _
      $region32: #{tpu_custom_call.1} parent=5 // pred_fallthru
        _
      %p967 = scmp.le.s32.totalorder 2, %s21
      // Predicated region
      $region49: #{tpu_custom_call.1} parent=5 // pred_check
        %p968 = pneg %p967
      $region50: #{tpu_custom_call.1} parent=5 // pred_check_branch
        %970 = sbr.rel (%p968) target = $region52
      $region51: #{tpu_custom_call.1} parent=5 // pred_region
        %s971 = ssub.s32 %s21, 2
        // Predicated region
        $region53: #{tpu_custom_call.1} parent=51 // pred_check
          %p972 = pneg %p118
        $region54: #{tpu_custom_call.1} parent=51 // pred_check_branch
          %974 = sbr.rel (%p972) target = $region56
        $region55: #{tpu_custom_call.1} parent=51 // pred_region
          %s975 = sand.u32 %s103, 1
          %s976 = scalar_lea.sflag [#allocation4], %s975
          %s977 = sand.u32 %s103, 1
          %s978 = smul.addr %s977, 64
          %s979 = scalar_lea.vmem [#allocation5], %s978
          %980 = dma.done %s976, 1024
        $region56: #{tpu_custom_call.1} parent=51 // pred_fallthru
          _
        // Predicated region
        $region57: #{tpu_custom_call.1} parent=51 // pred_check
          %p981 = pneg %p144
        $region58: #{tpu_custom_call.1} parent=51 // pred_check_branch
          %983 = sbr.rel (%p981) target = $region60
        $region59: #{tpu_custom_call.1} parent=51 // pred_region
          %s984 = sand.u32 %s27, 1
          %s985 = scalar_lea.sflag [#allocation7], %s984
          %s986 = sand.u32 %s129, 1
          %s987 = scalar_lea.vmem [#allocation6], %s986
          %988 = dma.done %s985, 16
        $region60: #{tpu_custom_call.1} parent=51 // pred_fallthru
          _
        // Predicated region
        $region61: #{tpu_custom_call.1} parent=51 // pred_check
          %p989 = pneg %p170
        $region62: #{tpu_custom_call.1} parent=51 // pred_check_branch
          %991 = sbr.rel (%p989) target = $region64
        $region63: #{tpu_custom_call.1} parent=51 // pred_region
          %s992 = sand.u32 %s27, 1
          %s993 = scalar_lea.sflag [#allocation7], %s992
          %s994 = sand.u32 %s155, 1
          %s995 = scalar_lea.vmem [#allocation8], %s994
          %996 = dma.done %s993, 16
        $region64: #{tpu_custom_call.1} parent=51 // pred_fallthru
          _
      $region52: #{tpu_custom_call.1} parent=5 // pred_fallthru
        _
    $region6: #{tpu_custom_call.1} parent=1 // loop_footer
      %s25 = sadd.s32 1, %s21
    $region7: #{tpu_custom_call.1} parent=1 // loop_footer_branch
      %20 = sbr.rel target = $region3
    $region8: #{tpu_custom_call.1} parent=1 // loop_exit
      _
    %997 = vsyncpa [#allocation3], 1
    %s998 = scalar_lea.sflag [#allocation3], 1
    %999 = vsyncpa %s998, 1
    %1000 = vsyncpa [#allocation4], 1
    %s1001 = scalar_lea.sflag [#allocation4], 1
    %1002 = vsyncpa %s1001, 1
    %1003 = vsyncpa [#allocation7], 1
    %s1004 = scalar_lea.sflag [#allocation7], 1
    %1005 = vsyncpa %s1004, 1

</llo_original>
